<compile_context>
chip_gen: v6e
topology: v6e:2x2x1
jax: 0.10.0
libtpu: 0.0.40
codegen_flags: <defaults>
</compile_context>

<pallas_src>
import jax
import jax.numpy as jnp
from jax.experimental import pallas as pl
from jax.experimental.pallas import tpu as pltpu


def mstcrn_seq_kernel(sched_ref,               # SMEM (2,) int32: [start_step, slow_update_rate]
                      x_ref,                   # [1, B, K*C]   (block t of [T, B, K*C])
                      fast0_ref, slow0_ref,    # [B, 3H]       initial states (read at t==0)
                      wconv_ref, bconv_ref,    # [K*C, H] bf16, [1, H] f32
                      wf_ref, bf_ref,          # fast: [3, 2H, H] bf16, [3, 1, H] f32
                      ws_ref, bs_ref,          # slow block-diag: [6H, 3H] bf16, [1, 3H] f32
                      wfu_ref, bfu_ref,        # fusion: [2H, H] bf16, [1, H] f32
                      wfc_ref, bfc_ref,        # [H, O] bf16, [1, O] f32
                      logp_ref,                # [1, B, O]     (block t of [T, B, O])
                      fast_out_ref, slow_out_ref,   # [B, 3H] final states
                      fast_h, slow_h, xh2, xh6):    # VMEM scratch (persist across grid steps)
    f32 = jnp.float32
    bf16 = jnp.bfloat16
    H = wconv_ref.shape[1]
    t = pl.program_id(0)

    # load initial recurrent state into resident scratch once
    @pl.when(t == 0)
    def _init_state():
        fast_h[...] = fast0_ref[...]
        slow_h[...] = slow0_ref[...]

    # temporal conv (full-window Conv1d == Linear over flattened frames) + ReLU
    z = jnp.maximum(
        jnp.dot(x_ref[0].astype(bf16), wconv_ref[...],
                preferred_element_type=f32) + bconv_ref[...],
        0.0)

    # fast recurrent stack (sequential): one fused [B,2H]@[2H,H] dot per layer,
    # operand staged into a fixed-layout scratch tile (no concatenates).
    fast_in = z
    for i in range(3):
        xh2[:, :H] = fast_in
        xh2[:, H:] = fast_h[:, i * H:(i + 1) * H]
        nh = jnp.maximum(
            jnp.dot(xh2[...].astype(bf16), wf_ref[i],
                    preferred_element_type=f32) + bf_ref[i],
            0.0)
        fast_h[:, i * H:(i + 1) * H] = nh
        fast_in = nh

    # slow recurrent stack: gated on (step_count % rate == 0).  When skipped,
    # the resident scratch state simply persists (no copy, no HBM traffic).
    step = sched_ref[0] + t
    @pl.when(step % sched_ref[1] == 0)
    def _update_slow():
        # 3 independent layers fused as one block-diagonal [B,6H]@[6H,3H] dot.
        for i in range(3):
            xh6[:, 2 * i * H:(2 * i + 1) * H] = fast_h[:, i * H:(i + 1) * H]
            xh6[:, (2 * i + 1) * H:(2 * i + 2) * H] = slow_h[:, i * H:(i + 1) * H]
        slow_h[...] = jnp.maximum(
            jnp.dot(xh6[...].astype(bf16), ws_ref[...],
                    preferred_element_type=f32) + bs_ref[...],
            0.0)

    # output fusion: cat([fast_nh2, slow_nh2]) -> Linear -> ReLU
    # (flatten([B,H]) is a no-op; ReLU(ReLU(x)) == ReLU(x))
    xh2[:, :H] = fast_h[:, 2 * H:]
    xh2[:, H:] = slow_h[:, 2 * H:]
    fused = jnp.maximum(
        jnp.dot(xh2[...].astype(bf16), wfu_ref[...],
                preferred_element_type=f32) + bfu_ref[...],
        0.0)
    logits = jnp.dot(fused.astype(bf16), wfc_ref[...],
                     preferred_element_type=f32) + bfc_ref[...]

    # log_softmax over the class dimension
    m = jnp.max(logits, axis=-1, keepdims=True)
    lse = m + jnp.log(jnp.sum(jnp.exp(logits - m), axis=-1, keepdims=True))
    logp_ref[0] = logits - lse

    # state leaves VMEM only once, at the final timestep
    @pl.when(t == pl.num_programs(0) - 1)
    def _writeback():
        fast_out_ref[...] = fast_h[...]
        slow_out_ref[...] = slow_h[...]


@jax.jit
def mstcrn_forward_seq(kparams, xs, state, slow_update_rate):
    """Run T MSTCRN steps in one kernel.

    xs:    [T, B, K, C]  sequence of frame segments.
    state: {'fast': [B, 3H], 'slow': [B, 3H], 'step_count': int32 scalar}
           (layer i occupies columns i*H:(i+1)*H of the lane-dense slabs).
    Returns (log_probs [T, B, O], new_state).
    """
    T, B, K, C = xs.shape
    KC = K * C
    H = kparams["bconv"].shape[1]
    O = kparams["wfc"].shape[1]
    H3 = 3 * H

    x_flat = xs.reshape(T, B, KC)
    sched = jnp.stack([state["step_count"].astype(jnp.int32),
                       jnp.asarray(slow_update_rate, jnp.int32)])

    grid_spec = pltpu.PrefetchScalarGridSpec(
        num_scalar_prefetch=1,
        grid=(T,),
        in_specs=[
            pl.BlockSpec((1, B, KC), lambda t, s: (t, 0, 0)),        # x (per step)
            pl.BlockSpec((B, H3), lambda t, s: (0, 0)),              # fast0
            pl.BlockSpec((B, H3), lambda t, s: (0, 0)),              # slow0
            pl.BlockSpec((KC, H), lambda t, s: (0, 0)),              # wconv
            pl.BlockSpec((1, H), lambda t, s: (0, 0)),               # bconv
            pl.BlockSpec((3, 2 * H, H), lambda t, s: (0, 0, 0)),     # wf_cat
            pl.BlockSpec((3, 1, H), lambda t, s: (0, 0, 0)),         # bf
            pl.BlockSpec((6 * H, H3), lambda t, s: (0, 0)),          # ws_bd
            pl.BlockSpec((1, H3), lambda t, s: (0, 0)),              # bs_cat
            pl.BlockSpec((2 * H, H), lambda t, s: (0, 0)),           # wfu_cat
            pl.BlockSpec((1, H), lambda t, s: (0, 0)),               # bfu
            pl.BlockSpec((H, O), lambda t, s: (0, 0)),               # wfc
            pl.BlockSpec((1, O), lambda t, s: (0, 0)),               # bfc
        ],
        out_specs=(
            pl.BlockSpec((1, B, O), lambda t, s: (t, 0, 0)),         # logp (per step)
            pl.BlockSpec((B, H3), lambda t, s: (0, 0)),              # final fast state
            pl.BlockSpec((B, H3), lambda t, s: (0, 0)),              # final slow state
        ),
        scratch_shapes=[
            pltpu.VMEM((B, H3), jnp.float32),       # fast_h (resident)
            pltpu.VMEM((B, H3), jnp.float32),       # slow_h (resident)
            pltpu.VMEM((B, 2 * H), jnp.float32),    # staged [x ; h] operand
            pltpu.VMEM((B, 6 * H), jnp.float32),    # staged slow block-diag operand
        ],
    )

    logp, new_fast, new_slow = pl.pallas_call(
        mstcrn_seq_kernel,
        grid_spec=grid_spec,
        out_shape=(
            jax.ShapeDtypeStruct((T, B, O), jnp.float32),
            jax.ShapeDtypeStruct((B, H3), jnp.float32),
            jax.ShapeDtypeStruct((B, H3), jnp.float32),
        ),
        compiler_params=pltpu.CompilerParams(
            dimension_semantics=("arbitrary",)),     # recurrent: sequential grid
    )(sched, x_flat,
      state["fast"], state["slow"],
      kparams["wconv"], kparams["bconv"],
      kparams["wf_cat"], kparams["bf"],
      kparams["ws_bd"], kparams["bs_cat"],
      kparams["wfu_cat"], kparams["bfu"],
      kparams["wfc"], kparams["bfc"])

    new_state = {"fast": new_fast, "slow": new_slow,
                 "step_count": state["step_count"] + T}
    return logp, new_state


def init_params(key, input_dim, output_dim, hidden_size, frames_per_segment):
    """Deterministic synthetic parameters (right-multiply layout, unpacked f32)."""
    H, C, K, O = hidden_size, input_dim, frames_per_segment, output_dim
    keys = jax.random.split(key, 16)
    s = 0.1

    def rnd(k, shape):
        return (s * jax.random.normal(k, shape)).astype(jnp.float32)

    # Conv1d weight [H, C, K] -> [K*C, H] (kernel spans the full window)
    wconv_torch = rnd(keys[0], (H, C, K))
    wconv = jnp.transpose(wconv_torch, (2, 1, 0)).reshape(K * C, H)
    return {
        "wconv": wconv,
        "bconv": rnd(keys[1], (1, H)),
        "wfx": rnd(keys[2], (3, H, H)),
        "wfh": rnd(keys[3], (3, H, H)),
        "bf": rnd(keys[4], (3, 1, H)),
        "wsx": rnd(keys[5], (3, H, H)),
        "wsh": rnd(keys[6], (3, H, H)),
        "bs": rnd(keys[7], (3, 1, H)),
        "wfu_f": rnd(keys[8], (H, H)),
        "wfu_s": rnd(keys[9], (H, H)),
        "bfu": rnd(keys[10], (1, H)),
        "wfc": rnd(keys[11], (H, O)),
        "bfc": rnd(keys[12], (1, O)),
    }


def pack_params(p):
    """Host-side weight packing into the fused kernel layout (matmul weights in bf16)."""
    bf16 = jnp.bfloat16
    H = p["wfx"].shape[-1]
    # fast: [3, 2H, H] (rows = [wfx_i ; wfh_i])
    wf_cat = jnp.concatenate([p["wfx"], p["wfh"]], axis=1)
    # slow: block-diagonal [6H, 3H]; input block i = [fast_out_i ; slow_h_i]
    ws_bd = jnp.zeros((6 * H, 3 * H), dtype=jnp.float32)
    for i in range(3):
        blk = jnp.concatenate([p["wsx"][i], p["wsh"][i]], axis=0)      # [2H, H]
        ws_bd = ws_bd.at[2 * H * i:2 * H * (i + 1), H * i:H * (i + 1)].set(blk)
    bs_cat = jnp.concatenate([p["bs"][i] for i in range(3)], axis=-1)  # [1, 3H]
    # fusion: [2H, H]
    wfu_cat = jnp.concatenate([p["wfu_f"], p["wfu_s"]], axis=0)
    return {
        "wconv": p["wconv"].astype(bf16), "bconv": p["bconv"],
        "wf_cat": wf_cat.astype(bf16), "bf": p["bf"],
        "ws_bd": ws_bd.astype(bf16), "bs_cat": bs_cat,
        "wfu_cat": wfu_cat.astype(bf16), "bfu": p["bfu"],
        "wfc": p["wfc"].astype(bf16), "bfc": p["bfc"],
    }


def reference_forward_seq(kparams, xs, state, slow_update_rate):
    """Pure-JAX step-by-step reference mirroring the PyTorch forward
    (dropout = identity).  Uses the same bf16 weights / bf16-cast matmul LHS
    as the kernel so the comparison is like-for-like."""
    bf16, f32 = jnp.bfloat16, jnp.float32
    T, B, K, C = xs.shape
    H = kparams["bconv"].shape[1]

    def dot(a, w):
        return jnp.dot(a.astype(bf16), w, preferred_element_type=f32)

    fast, slow = state["fast"], state["slow"]            # [B, 3H] each
    step = int(state["step_count"])
    logps = []
    for t in range(T):
        x = xs[t].reshape(B, K * C)
        z = jax.nn.relu(dot(x, kparams["wconv"]) + kparams["bconv"])
        fast_in, new_fast = z, []
        for i in range(3):
            xh = jnp.concatenate([fast_in, fast[:, i * H:(i + 1) * H]], axis=-1)
            nh = jax.nn.relu(dot(xh, kparams["wf_cat"][i]) + kparams["bf"][i])
            new_fast.append(nh)
            fast_in = nh
        fast = jnp.concatenate(new_fast, axis=-1)
        if (step + t) % slow_update_rate == 0:
            new_slow = []
            for i in range(3):
                blk = kparams["ws_bd"][2 * H * i:2 * H * (i + 1), H * i:H * (i + 1)]
                b = kparams["bs_cat"][:, i * H:(i + 1) * H]
                xh = jnp.concatenate([new_fast[i], slow[:, i * H:(i + 1) * H]], axis=-1)
                new_slow.append(jax.nn.relu(dot(xh, blk) + b))
            slow = jnp.concatenate(new_slow, axis=-1)
        xh = jnp.concatenate([fast[:, 2 * H:], slow[:, 2 * H:]], axis=-1)
        fused = jax.nn.relu(dot(xh, kparams["wfu_cat"]) + kparams["bfu"])
        logits = dot(fused, kparams["wfc"]) + kparams["bfc"]
        logps.append(jax.nn.log_softmax(logits, axis=-1))
    new_state = {"fast": fast, "slow": slow,
                 "step_count": jnp.asarray(step + T, jnp.int32)}
    return jnp.stack(logps), new_state


if __name__ == "__main__":
    B, C, K, H, O = 8, 4, 3, 32, 8        # sublane-full batch
    T = 16
    slow_update_rate = 5                  # updates at t = 0, 5, 10, 15 in call 1

    key = jax.random.PRNGKey(0)
    k_param, k_x, k_fast, k_slow = jax.random.split(key, 4)

    params = init_params(k_param, input_dim=C, output_dim=O,
                         hidden_size=H, frames_per_segment=K)
    kparams = pack_params(params)

    xs = jax.random.normal(k_x, (T, B, K, C), dtype=jnp.float32)
    state0 = {
        "fast": jax.random.normal(k_fast, (B, 3 * H), dtype=jnp.float32),
        "slow": jax.random.normal(k_slow, (B, 3 * H), dtype=jnp.float32),
        "step_count": jnp.asarray(0, dtype=jnp.int32),
    }

    # call 1: starts on a slow-update step (exercises both branches of pl.when)
    logp, state1 = mstcrn_forward_seq(kparams, xs, state0, slow_update_rate)
    jax.block_until_ready(logp)
    jax.block_until_ready(state1["fast"])
    jax.block_until_ready(state1["slow"])

    ref_logp, ref_state1 = reference_forward_seq(kparams, xs, state0, slow_update_rate)
    assert jnp.allclose(logp, ref_logp, atol=1e-4, rtol=1e-4), \
        f"logp mismatch: {float(jnp.max(jnp.abs(logp - ref_logp)))}"
    assert jnp.allclose(state1["fast"], ref_state1["fast"], atol=1e-4, rtol=1e-4)
    assert jnp.allclose(state1["slow"], ref_state1["slow"], atol=1e-4, rtol=1e-4)
    assert int(state1["step_count"]) == T

    # call 2: carried state, off-phase schedule (step_count=16 -> updates at t=4,9,14)
    xs2 = jax.random.normal(jax.random.fold_in(k_x, 1), (T, B, K, C), dtype=jnp.float32)
    logp2, state2 = mstcrn_forward_seq(kparams, xs2, state1, slow_update_rate)
    jax.block_until_ready(logp2)
    jax.block_until_ready(state2["fast"])
    jax.block_until_ready(state2["slow"])

    ref_logp2, ref_state2 = reference_forward_seq(kparams, xs2, ref_state1, slow_update_rate)
    assert jnp.allclose(logp2, ref_logp2, atol=1e-4, rtol=1e-4), \
        f"logp2 mismatch: {float(jnp.max(jnp.abs(logp2 - ref_logp2)))}"
    assert jnp.allclose(state2["fast"], ref_state2["fast"], atol=1e-4, rtol=1e-4)
    assert jnp.allclose(state2["slow"], ref_state2["slow"], atol=1e-4, rtol=1e-4)

    print("KERNEL_OK")
</pallas_src>

<mosaic_0001>
module attributes {stable_mosaic.version = 11 : i64} {
  func.func @mstcrn_seq_kernel(%arg0: i32, %arg1: memref<2xi32, #tpu.memory_space<smem>>, %arg2: memref<1x8x12xf32, #tpu.memory_space<vmem>>, %arg3: memref<8x96xf32, #tpu.memory_space<vmem>>, %arg4: memref<8x96xf32, #tpu.memory_space<vmem>>, %arg5: memref<12x32xbf16, #tpu.memory_space<vmem>>, %arg6: memref<1x32xf32, #tpu.memory_space<vmem>>, %arg7: memref<3x64x32xbf16, #tpu.memory_space<vmem>>, %arg8: memref<3x1x32xf32, #tpu.memory_space<vmem>>, %arg9: memref<192x96xbf16, #tpu.memory_space<vmem>>, %arg10: memref<1x96xf32, #tpu.memory_space<vmem>>, %arg11: memref<64x32xbf16, #tpu.memory_space<vmem>>, %arg12: memref<1x32xf32, #tpu.memory_space<vmem>>, %arg13: memref<32x8xbf16, #tpu.memory_space<vmem>>, %arg14: memref<1x8xf32, #tpu.memory_space<vmem>>, %arg15: memref<1x8x8xf32, #tpu.memory_space<vmem>>, %arg16: memref<8x96xf32, #tpu.memory_space<vmem>>, %arg17: memref<8x96xf32, #tpu.memory_space<vmem>>, %arg18: memref<8x96xf32, #tpu.memory_space<vmem>>, %arg19: memref<8x96xf32, #tpu.memory_space<vmem>>, %arg20: memref<8x64xf32, #tpu.memory_space<vmem>>, %arg21: memref<8x192xf32, #tpu.memory_space<vmem>>) attributes {dimension_semantics = [#tpu.dimension_semantics<arbitrary>], iteration_bounds = array<i64: 16>, scalar_prefetch = 1 : i64, scratch_operands = 4 : i64, tpu.core_type = #tpu.core_type<tc>, window_params = [{transform_indices = @transform_0, window_bounds = array<i64: 1, 8, 12>}, {pipeline_mode = #tpu.pipeline_mode<synchronous>, transform_indices = @transform_1, window_bounds = array<i64: 8, 96>}, {pipeline_mode = #tpu.pipeline_mode<synchronous>, transform_indices = @transform_2, window_bounds = array<i64: 8, 96>}, {pipeline_mode = #tpu.pipeline_mode<synchronous>, transform_indices = @transform_3, window_bounds = array<i64: 12, 32>}, {pipeline_mode = #tpu.pipeline_mode<synchronous>, transform_indices = @transform_4, window_bounds = array<i64: 1, 32>}, {pipeline_mode = #tpu.pipeline_mode<synchronous>, transform_indices = @transform_5, window_bounds = array<i64: 3, 64, 32>}, {pipeline_mode = #tpu.pipeline_mode<synchronous>, transform_indices = @transform_6, window_bounds = array<i64: 3, 1, 32>}, {pipeline_mode = #tpu.pipeline_mode<synchronous>, transform_indices = @transform_7, window_bounds = array<i64: 192, 96>}, {pipeline_mode = #tpu.pipeline_mode<synchronous>, transform_indices = @transform_8, window_bounds = array<i64: 1, 96>}, {pipeline_mode = #tpu.pipeline_mode<synchronous>, transform_indices = @transform_9, window_bounds = array<i64: 64, 32>}, {pipeline_mode = #tpu.pipeline_mode<synchronous>, transform_indices = @transform_10, window_bounds = array<i64: 1, 32>}, {pipeline_mode = #tpu.pipeline_mode<synchronous>, transform_indices = @transform_11, window_bounds = array<i64: 32, 8>}, {pipeline_mode = #tpu.pipeline_mode<synchronous>, transform_indices = @transform_12, window_bounds = array<i64: 1, 8>}, {transform_indices = @transform_13, window_bounds = array<i64: 1, 8, 8>}, {pipeline_mode = #tpu.pipeline_mode<synchronous>, transform_indices = @transform_14, window_bounds = array<i64: 8, 96>}, {pipeline_mode = #tpu.pipeline_mode<synchronous>, transform_indices = @transform_15, window_bounds = array<i64: 8, 96>}]} {
    %c0_i32 = arith.constant 0 : i32
    %0 = arith.cmpi eq, %arg0, %c0_i32 : i32
    %1 = arith.extui %0 : i1 to i32
    %c0_i32_0 = arith.constant 0 : i32
    %2 = arith.cmpi ne, %1, %c0_i32_0 : i32
    scf.if %2 {
      %c0_93 = arith.constant 0 : index
      %c0_94 = arith.constant 0 : index
      %110 = vector.load %arg3[%c0_93, %c0_94] : memref<8x96xf32, #tpu.memory_space<vmem>>, vector<8x96xf32>
      %c0_95 = arith.constant 0 : index
      %c0_96 = arith.constant 0 : index
      %111 = vector.load %arg18[%c0_95, %c0_96] : memref<8x96xf32, #tpu.memory_space<vmem>>, vector<8x96xf32>
      tpu.vector_store %arg18[%c0_95, %c0_96], %110 {strides = array<i32>} : memref<8x96xf32, #tpu.memory_space<vmem>>, vector<8x96xf32>,
      %c0_97 = arith.constant 0 : index
      %c0_98 = arith.constant 0 : index
      %112 = vector.load %arg4[%c0_97, %c0_98] : memref<8x96xf32, #tpu.memory_space<vmem>>, vector<8x96xf32>
      %c0_99 = arith.constant 0 : index
      %c0_100 = arith.constant 0 : index
      %113 = vector.load %arg19[%c0_99, %c0_100] : memref<8x96xf32, #tpu.memory_space<vmem>>, vector<8x96xf32>
      tpu.vector_store %arg19[%c0_99, %c0_100], %112 {strides = array<i32>} : memref<8x96xf32, #tpu.memory_space<vmem>>, vector<8x96xf32>,
    } else {
    }
    %c0 = arith.constant 0 : index
    %c0_1 = arith.constant 0 : index
    %c0_2 = arith.constant 0 : index
    %3 = vector.load %arg2[%c0, %c0_1, %c0_2] : memref<1x8x12xf32, #tpu.memory_space<vmem>>, vector<1x8x12xf32>
    %4 = vector.shape_cast %3 : vector<1x8x12xf32> to vector<8x12xf32>
    %5 = arith.truncf %4 : vector<8x12xf32> to vector<8x12xbf16>
    %c0_3 = arith.constant 0 : index
    %c0_4 = arith.constant 0 : index
    %6 = vector.load %arg5[%c0_3, %c0_4] : memref<12x32xbf16, #tpu.memory_space<vmem>>, vector<12x32xbf16>
    %cst = arith.constant dense<0.000000e+00> : vector<8x32xf32>
    %7 = tpu.matmul %5, %6, %cst {dimension_numbers = #tpu.dot_dimension_numbers<[1], [0], [0], [1], [0, 0, 1, 1], [], []>} : vector<8x12xbf16>, vector<12x32xbf16>, vector<8x32xf32> -> vector<8x32xf32>
    %c0_5 = arith.constant 0 : index
    %c0_6 = arith.constant 0 : index
    %8 = vector.load %arg6[%c0_5, %c0_6] : memref<1x32xf32, #tpu.memory_space<vmem>>, vector<1x32xf32>
    %9 = vector.broadcast %8 : vector<1x32xf32> to vector<8x32xf32>
    %10 = arith.addf %7, %9 : vector<8x32xf32>
    %cst_7 = arith.constant 0.000000e+00 : f32
    %11 = vector.broadcast %cst_7 : f32 to vector<8x32xf32>
    %12 = arith.maximumf %10, %11 : vector<8x32xf32>
    %c0_8 = arith.constant 0 : index
    %c0_9 = arith.constant 0 : index
    %13 = vector.load %arg20[%c0_8, %c0_9] : memref<8x64xf32, #tpu.memory_space<vmem>>, vector<8x32xf32>
    tpu.vector_store %arg20[%c0_8, %c0_9], %12 {strides = array<i32>} : memref<8x64xf32, #tpu.memory_space<vmem>>, vector<8x32xf32>,
    %c0_10 = arith.constant 0 : index
    %c0_11 = arith.constant 0 : index
    %14 = vector.load %arg18[%c0_10, %c0_11] : memref<8x96xf32, #tpu.memory_space<vmem>>, vector<8x32xf32>
    %c0_12 = arith.constant 0 : index
    %c32 = arith.constant 32 : index
    %15 = vector.load %arg20[%c0_12, %c32] : memref<8x64xf32, #tpu.memory_space<vmem>>, vector<8x32xf32>
    tpu.vector_store %arg20[%c0_12, %c32], %14 {strides = array<i32>} : memref<8x64xf32, #tpu.memory_space<vmem>>, vector<8x32xf32>,
    %c0_13 = arith.constant 0 : index
    %c0_14 = arith.constant 0 : index
    %16 = vector.load %arg20[%c0_13, %c0_14] : memref<8x64xf32, #tpu.memory_space<vmem>>, vector<8x64xf32>
    %17 = arith.truncf %16 : vector<8x64xf32> to vector<8x64xbf16>
    %c0_15 = arith.constant 0 : index
    %c0_16 = arith.constant 0 : index
    %c0_17 = arith.constant 0 : index
    %18 = vector.load %arg7[%c0_15, %c0_16, %c0_17] : memref<3x64x32xbf16, #tpu.memory_space<vmem>>, vector<1x64x32xbf16>
    %19 = vector.shape_cast %18 : vector<1x64x32xbf16> to vector<64x32xbf16>
    %cst_18 = arith.constant dense<0.000000e+00> : vector<8x32xf32>
    %20 = tpu.matmul %17, %19, %cst_18 {dimension_numbers = #tpu.dot_dimension_numbers<[1], [0], [0], [1], [0, 0, 1, 1], [], []>} : vector<8x64xbf16>, vector<64x32xbf16>, vector<8x32xf32> -> vector<8x32xf32>
    %c0_19 = arith.constant 0 : index
    %c0_20 = arith.constant 0 : index
    %c0_21 = arith.constant 0 : index
    %21 = vector.load %arg8[%c0_19, %c0_20, %c0_21] : memref<3x1x32xf32, #tpu.memory_space<vmem>>, vector<1x1x32xf32>
    %22 = vector.shape_cast %21 : vector<1x1x32xf32> to vector<1x32xf32>
    %23 = vector.broadcast %22 : vector<1x32xf32> to vector<8x32xf32>
    %24 = arith.addf %20, %23 : vector<8x32xf32>
    %cst_22 = arith.constant 0.000000e+00 : f32
    %25 = vector.broadcast %cst_22 : f32 to vector<8x32xf32>
    %26 = arith.maximumf %24, %25 : vector<8x32xf32>
    %c0_23 = arith.constant 0 : index
    %c0_24 = arith.constant 0 : index
    %27 = vector.load %arg18[%c0_23, %c0_24] : memref<8x96xf32, #tpu.memory_space<vmem>>, vector<8x32xf32>
    tpu.vector_store %arg18[%c0_23, %c0_24], %26 {strides = array<i32>} : memref<8x96xf32, #tpu.memory_space<vmem>>, vector<8x32xf32>,
    %c0_25 = arith.constant 0 : index
    %c0_26 = arith.constant 0 : index
    %28 = vector.load %arg20[%c0_25, %c0_26] : memref<8x64xf32, #tpu.memory_space<vmem>>, vector<8x32xf32>
    tpu.vector_store %arg20[%c0_25, %c0_26], %26 {strides = array<i32>} : memref<8x64xf32, #tpu.memory_space<vmem>>, vector<8x32xf32>,
    %c0_27 = arith.constant 0 : index
    %c32_28 = arith.constant 32 : index
    %29 = vector.load %arg18[%c0_27, %c32_28] : memref<8x96xf32, #tpu.memory_space<vmem>>, vector<8x32xf32>
    %c0_29 = arith.constant 0 : index
    %c32_30 = arith.constant 32 : index
    %30 = vector.load %arg20[%c0_29, %c32_30] : memref<8x64xf32, #tpu.memory_space<vmem>>, vector<8x32xf32>
    tpu.vector_store %arg20[%c0_29, %c32_30], %29 {strides = array<i32>} : memref<8x64xf32, #tpu.memory_space<vmem>>, vector<8x32xf32>,
    %c0_31 = arith.constant 0 : index
    %c0_32 = arith.constant 0 : index
    %31 = vector.load %arg20[%c0_31, %c0_32] : memref<8x64xf32, #tpu.memory_space<vmem>>, vector<8x64xf32>
    %32 = arith.truncf %31 : vector<8x64xf32> to vector<8x64xbf16>
    %c1 = arith.constant 1 : index
    %c0_33 = arith.constant 0 : index
    %c0_34 = arith.constant 0 : index
    %33 = vector.load %arg7[%c1, %c0_33, %c0_34] : memref<3x64x32xbf16, #tpu.memory_space<vmem>>, vector<1x64x32xbf16>
    %34 = vector.shape_cast %33 : vector<1x64x32xbf16> to vector<64x32xbf16>
    %cst_35 = arith.constant dense<0.000000e+00> : vector<8x32xf32>
    %35 = tpu.matmul %32, %34, %cst_35 {dimension_numbers = #tpu.dot_dimension_numbers<[1], [0], [0], [1], [0, 0, 1, 1], [], []>} : vector<8x64xbf16>, vector<64x32xbf16>, vector<8x32xf32> -> vector<8x32xf32>
    %c1_36 = arith.constant 1 : index
    %c0_37 = arith.constant 0 : index
    %c0_38 = arith.constant 0 : index
    %36 = vector.load %arg8[%c1_36, %c0_37, %c0_38] : memref<3x1x32xf32, #tpu.memory_space<vmem>>, vector<1x1x32xf32>
    %37 = vector.shape_cast %36 : vector<1x1x32xf32> to vector<1x32xf32>
    %38 = vector.broadcast %37 : vector<1x32xf32> to vector<8x32xf32>
    %39 = arith.addf %35, %38 : vector<8x32xf32>
    %cst_39 = arith.constant 0.000000e+00 : f32
    %40 = vector.broadcast %cst_39 : f32 to vector<8x32xf32>
    %41 = arith.maximumf %39, %40 : vector<8x32xf32>
    %c0_40 = arith.constant 0 : index
    %c32_41 = arith.constant 32 : index
    %42 = vector.load %arg18[%c0_40, %c32_41] : memref<8x96xf32, #tpu.memory_space<vmem>>, vector<8x32xf32>
    tpu.vector_store %arg18[%c0_40, %c32_41], %41 {strides = array<i32>} : memref<8x96xf32, #tpu.memory_space<vmem>>, vector<8x32xf32>,
    %c0_42 = arith.constant 0 : index
    %c0_43 = arith.constant 0 : index
    %43 = vector.load %arg20[%c0_42, %c0_43] : memref<8x64xf32, #tpu.memory_space<vmem>>, vector<8x32xf32>
    tpu.vector_store %arg20[%c0_42, %c0_43], %41 {strides = array<i32>} : memref<8x64xf32, #tpu.memory_space<vmem>>, vector<8x32xf32>,
    %c0_44 = arith.constant 0 : index
    %c64 = arith.constant 64 : index
    %44 = vector.load %arg18[%c0_44, %c64] : memref<8x96xf32, #tpu.memory_space<vmem>>, vector<8x32xf32>
    %c0_45 = arith.constant 0 : index
    %c32_46 = arith.constant 32 : index
    %45 = vector.load %arg20[%c0_45, %c32_46] : memref<8x64xf32, #tpu.memory_space<vmem>>, vector<8x32xf32>
    tpu.vector_store %arg20[%c0_45, %c32_46], %44 {strides = array<i32>} : memref<8x64xf32, #tpu.memory_space<vmem>>, vector<8x32xf32>,
    %c0_47 = arith.constant 0 : index
    %c0_48 = arith.constant 0 : index
    %46 = vector.load %arg20[%c0_47, %c0_48] : memref<8x64xf32, #tpu.memory_space<vmem>>, vector<8x64xf32>
    %47 = arith.truncf %46 : vector<8x64xf32> to vector<8x64xbf16>
    %c2 = arith.constant 2 : index
    %c0_49 = arith.constant 0 : index
    %c0_50 = arith.constant 0 : index
    %48 = vector.load %arg7[%c2, %c0_49, %c0_50] : memref<3x64x32xbf16, #tpu.memory_space<vmem>>, vector<1x64x32xbf16>
    %49 = vector.shape_cast %48 : vector<1x64x32xbf16> to vector<64x32xbf16>
    %cst_51 = arith.constant dense<0.000000e+00> : vector<8x32xf32>
    %50 = tpu.matmul %47, %49, %cst_51 {dimension_numbers = #tpu.dot_dimension_numbers<[1], [0], [0], [1], [0, 0, 1, 1], [], []>} : vector<8x64xbf16>, vector<64x32xbf16>, vector<8x32xf32> -> vector<8x32xf32>
    %c2_52 = arith.constant 2 : index
    %c0_53 = arith.constant 0 : index
    %c0_54 = arith.constant 0 : index
    %51 = vector.load %arg8[%c2_52, %c0_53, %c0_54] : memref<3x1x32xf32, #tpu.memory_space<vmem>>, vector<1x1x32xf32>
    %52 = vector.shape_cast %51 : vector<1x1x32xf32> to vector<1x32xf32>
    %53 = vector.broadcast %52 : vector<1x32xf32> to vector<8x32xf32>
    %54 = arith.addf %50, %53 : vector<8x32xf32>
    %cst_55 = arith.constant 0.000000e+00 : f32
    %55 = vector.broadcast %cst_55 : f32 to vector<8x32xf32>
    %56 = arith.maximumf %54, %55 : vector<8x32xf32>
    %c0_56 = arith.constant 0 : index
    %c64_57 = arith.constant 64 : index
    %57 = vector.load %arg18[%c0_56, %c64_57] : memref<8x96xf32, #tpu.memory_space<vmem>>, vector<8x32xf32>
    tpu.vector_store %arg18[%c0_56, %c64_57], %56 {strides = array<i32>} : memref<8x96xf32, #tpu.memory_space<vmem>>, vector<8x32xf32>,
    %c0_58 = arith.constant 0 : index
    %58 = memref.load %arg1[%c0_58] : memref<2xi32, #tpu.memory_space<smem>>
    %59 = arith.addi %58, %arg0 : i32
    %c1_59 = arith.constant 1 : index
    %60 = memref.load %arg1[%c1_59] : memref<2xi32, #tpu.memory_space<smem>>
    %c0_i32_60 = arith.constant 0 : i32
    %61 = arith.cmpi eq, %60, %c0_i32_60 : i32
    %c1_i32 = arith.constant 1 : i32
    %62 = arith.select %61, %c1_i32, %60 : i32
    %63 = arith.remsi %59, %62 : i32
    %c0_i32_61 = arith.constant 0 : i32
    %64 = arith.cmpi ne, %63, %c0_i32_61 : i32
    %c0_i32_62 = arith.constant 0 : i32
    %65 = arith.cmpi slt, %63, %c0_i32_62 : i32
    %c0_i32_63 = arith.constant 0 : i32
    %66 = arith.cmpi slt, %62, %c0_i32_63 : i32
    %67 = arith.xori %65, %66 : i1
    %68 = arith.andi %67, %64 : i1
    %69 = arith.addi %63, %62 : i32
    %70 = arith.select %68, %69, %63 : i32
    %c0_i32_64 = arith.constant 0 : i32
    %71 = arith.cmpi eq, %70, %c0_i32_64 : i32
    %72 = arith.extui %71 : i1 to i32
    %c0_i32_65 = arith.constant 0 : i32
    %73 = arith.cmpi ne, %72, %c0_i32_65 : i32
    scf.if %73 {
      %c0_93 = arith.constant 0 : index
      %c0_94 = arith.constant 0 : index
      %110 = vector.load %arg18[%c0_93, %c0_94] : memref<8x96xf32, #tpu.memory_space<vmem>>, vector<8x32xf32>
      %c0_95 = arith.constant 0 : index
      %c0_96 = arith.constant 0 : index
      %111 = vector.load %arg21[%c0_95, %c0_96] : memref<8x192xf32, #tpu.memory_space<vmem>>, vector<8x32xf32>
      tpu.vector_store %arg21[%c0_95, %c0_96], %110 {strides = array<i32>} : memref<8x192xf32, #tpu.memory_space<vmem>>, vector<8x32xf32>,
      %c0_97 = arith.constant 0 : index
      %c0_98 = arith.constant 0 : index
      %112 = vector.load %arg19[%c0_97, %c0_98] : memref<8x96xf32, #tpu.memory_space<vmem>>, vector<8x32xf32>
      %c0_99 = arith.constant 0 : index
      %c32_100 = arith.constant 32 : index
      %113 = vector.load %arg21[%c0_99, %c32_100] : memref<8x192xf32, #tpu.memory_space<vmem>>, vector<8x32xf32>
      tpu.vector_store %arg21[%c0_99, %c32_100], %112 {strides = array<i32>} : memref<8x192xf32, #tpu.memory_space<vmem>>, vector<8x32xf32>,
      %c0_101 = arith.constant 0 : index
      %c32_102 = arith.constant 32 : index
      %114 = vector.load %arg18[%c0_101, %c32_102] : memref<8x96xf32, #tpu.memory_space<vmem>>, vector<8x32xf32>
      %c0_103 = arith.constant 0 : index
      %c64_104 = arith.constant 64 : index
      %115 = vector.load %arg21[%c0_103, %c64_104] : memref<8x192xf32, #tpu.memory_space<vmem>>, vector<8x32xf32>
      tpu.vector_store %arg21[%c0_103, %c64_104], %114 {strides = array<i32>} : memref<8x192xf32, #tpu.memory_space<vmem>>, vector<8x32xf32>,
      %c0_105 = arith.constant 0 : index
      %c32_106 = arith.constant 32 : index
      %116 = vector.load %arg19[%c0_105, %c32_106] : memref<8x96xf32, #tpu.memory_space<vmem>>, vector<8x32xf32>
      %c0_107 = arith.constant 0 : index
      %c96 = arith.constant 96 : index
      %117 = vector.load %arg21[%c0_107, %c96] : memref<8x192xf32, #tpu.memory_space<vmem>>, vector<8x32xf32>
      tpu.vector_store %arg21[%c0_107, %c96], %116 {strides = array<i32>} : memref<8x192xf32, #tpu.memory_space<vmem>>, vector<8x32xf32>,
      %c0_108 = arith.constant 0 : index
      %c64_109 = arith.constant 64 : index
      %118 = vector.load %arg18[%c0_108, %c64_109] : memref<8x96xf32, #tpu.memory_space<vmem>>, vector<8x32xf32>
      %c0_110 = arith.constant 0 : index
      %c128 = arith.constant 128 : index
      %119 = vector.load %arg21[%c0_110, %c128] : memref<8x192xf32, #tpu.memory_space<vmem>>, vector<8x32xf32>
      tpu.vector_store %arg21[%c0_110, %c128], %118 {strides = array<i32>} : memref<8x192xf32, #tpu.memory_space<vmem>>, vector<8x32xf32>,
      %c0_111 = arith.constant 0 : index
      %c64_112 = arith.constant 64 : index
      %120 = vector.load %arg19[%c0_111, %c64_112] : memref<8x96xf32, #tpu.memory_space<vmem>>, vector<8x32xf32>
      %c0_113 = arith.constant 0 : index
      %c160 = arith.constant 160 : index
      %121 = vector.load %arg21[%c0_113, %c160] : memref<8x192xf32, #tpu.memory_space<vmem>>, vector<8x32xf32>
      tpu.vector_store %arg21[%c0_113, %c160], %120 {strides = array<i32>} : memref<8x192xf32, #tpu.memory_space<vmem>>, vector<8x32xf32>,
      %c0_114 = arith.constant 0 : index
      %c0_115 = arith.constant 0 : index
      %122 = vector.load %arg21[%c0_114, %c0_115] : memref<8x192xf32, #tpu.memory_space<vmem>>, vector<8x192xf32>
      %123 = arith.truncf %122 : vector<8x192xf32> to vector<8x192xbf16>
      %c0_116 = arith.constant 0 : index
      %c0_117 = arith.constant 0 : index
      %124 = vector.load %arg9[%c0_116, %c0_117] : memref<192x96xbf16, #tpu.memory_space<vmem>>, vector<192x96xbf16>
      %cst_118 = arith.constant dense<0.000000e+00> : vector<8x96xf32>
      %125 = tpu.matmul %123, %124, %cst_118 {dimension_numbers = #tpu.dot_dimension_numbers<[1], [0], [0], [1], [0, 0, 1, 1], [], []>} : vector<8x192xbf16>, vector<192x96xbf16>, vector<8x96xf32> -> vector<8x96xf32>
      %c0_119 = arith.constant 0 : index
      %c0_120 = arith.constant 0 : index
      %126 = vector.load %arg10[%c0_119, %c0_120] : memref<1x96xf32, #tpu.memory_space<vmem>>, vector<1x96xf32>
      %127 = vector.broadcast %126 : vector<1x96xf32> to vector<8x96xf32>
      %128 = arith.addf %125, %127 : vector<8x96xf32>
      %cst_121 = arith.constant 0.000000e+00 : f32
      %129 = vector.broadcast %cst_121 : f32 to vector<8x96xf32>
      %130 = arith.maximumf %128, %129 : vector<8x96xf32>
      %c0_122 = arith.constant 0 : index
      %c0_123 = arith.constant 0 : index
      %131 = vector.load %arg19[%c0_122, %c0_123] : memref<8x96xf32, #tpu.memory_space<vmem>>, vector<8x96xf32>
      tpu.vector_store %arg19[%c0_122, %c0_123], %130 {strides = array<i32>} : memref<8x96xf32, #tpu.memory_space<vmem>>, vector<8x96xf32>,
    } else {
    }
    %c0_66 = arith.constant 0 : index
    %c64_67 = arith.constant 64 : index
    %74 = vector.load %arg18[%c0_66, %c64_67] : memref<8x96xf32, #tpu.memory_space<vmem>>, vector<8x32xf32>
    %c0_68 = arith.constant 0 : index
    %c0_69 = arith.constant 0 : index
    %75 = vector.load %arg20[%c0_68, %c0_69] : memref<8x64xf32, #tpu.memory_space<vmem>>, vector<8x32xf32>
    tpu.vector_store %arg20[%c0_68, %c0_69], %74 {strides = array<i32>} : memref<8x64xf32, #tpu.memory_space<vmem>>, vector<8x32xf32>,
    %c0_70 = arith.constant 0 : index
    %c64_71 = arith.constant 64 : index
    %76 = vector.load %arg19[%c0_70, %c64_71] : memref<8x96xf32, #tpu.memory_space<vmem>>, vector<8x32xf32>
    %c0_72 = arith.constant 0 : index
    %c32_73 = arith.constant 32 : index
    %77 = vector.load %arg20[%c0_72, %c32_73] : memref<8x64xf32, #tpu.memory_space<vmem>>, vector<8x32xf32>
    tpu.vector_store %arg20[%c0_72, %c32_73], %76 {strides = array<i32>} : memref<8x64xf32, #tpu.memory_space<vmem>>, vector<8x32xf32>,
    %c0_74 = arith.constant 0 : index
    %c0_75 = arith.constant 0 : index
    %78 = vector.load %arg20[%c0_74, %c0_75] : memref<8x64xf32, #tpu.memory_space<vmem>>, vector<8x64xf32>
    %79 = arith.truncf %78 : vector<8x64xf32> to vector<8x64xbf16>
    %c0_76 = arith.constant 0 : index
    %c0_77 = arith.constant 0 : index
    %80 = vector.load %arg11[%c0_76, %c0_77] : memref<64x32xbf16, #tpu.memory_space<vmem>>, vector<64x32xbf16>
    %cst_78 = arith.constant dense<0.000000e+00> : vector<8x32xf32>
    %81 = tpu.matmul %79, %80, %cst_78 {dimension_numbers = #tpu.dot_dimension_numbers<[1], [0], [0], [1], [0, 0, 1, 1], [], []>} : vector<8x64xbf16>, vector<64x32xbf16>, vector<8x32xf32> -> vector<8x32xf32>
    %c0_79 = arith.constant 0 : index
    %c0_80 = arith.constant 0 : index
    %82 = vector.load %arg12[%c0_79, %c0_80] : memref<1x32xf32, #tpu.memory_space<vmem>>, vector<1x32xf32>
    %83 = vector.broadcast %82 : vector<1x32xf32> to vector<8x32xf32>
    %84 = arith.addf %81, %83 : vector<8x32xf32>
    %cst_81 = arith.constant 0.000000e+00 : f32
    %85 = vector.broadcast %cst_81 : f32 to vector<8x32xf32>
    %86 = arith.maximumf %84, %85 : vector<8x32xf32>
    %87 = arith.truncf %86 : vector<8x32xf32> to vector<8x32xbf16>
    %c0_82 = arith.constant 0 : index
    %c0_83 = arith.constant 0 : index
    %88 = vector.load %arg13[%c0_82, %c0_83] : memref<32x8xbf16, #tpu.memory_space<vmem>>, vector<32x8xbf16>
    %cst_84 = arith.constant dense<0.000000e+00> : vector<8x8xf32>
    %89 = tpu.matmul %87, %88, %cst_84 {dimension_numbers = #tpu.dot_dimension_numbers<[1], [0], [0], [1], [0, 0, 1, 1], [], []>} : vector<8x32xbf16>, vector<32x8xbf16>, vector<8x8xf32> -> vector<8x8xf32>
    %c0_85 = arith.constant 0 : index
    %c0_86 = arith.constant 0 : index
    %90 = vector.load %arg14[%c0_85, %c0_86] : memref<1x8xf32, #tpu.memory_space<vmem>>, vector<1x8xf32>
    %91 = vector.broadcast %90 : vector<1x8xf32> to vector<8x8xf32>
    %92 = arith.addf %89, %91 : vector<8x8xf32>
    %cst_87 = arith.constant dense<0xFF800000> : vector<8xf32>
    %93 = vector.multi_reduction <maximumf>, %92, %cst_87 [1] : vector<8x8xf32> to vector<8xf32>
    %94 = vector.shape_cast %93 : vector<8xf32> to vector<8x1xf32>
    %95 = vector.broadcast %94 : vector<8x1xf32> to vector<8x8xf32>
    %96 = arith.subf %92, %95 : vector<8x8xf32>
    %97 = math.exp %96 : vector<8x8xf32>
    %cst_88 = arith.constant dense<0.000000e+00> : vector<8xf32>
    %98 = vector.multi_reduction <add>, %97, %cst_88 [1] : vector<8x8xf32> to vector<8xf32>
    %99 = vector.shape_cast %98 : vector<8xf32> to vector<8x1xf32>
    %100 = math.log %99 : vector<8x1xf32>
    %101 = arith.addf %94, %100 : vector<8x1xf32>
    %102 = vector.broadcast %101 : vector<8x1xf32> to vector<8x8xf32>
    %103 = arith.subf %92, %102 : vector<8x8xf32>
    %c0_89 = arith.constant 0 : index
    %c0_90 = arith.constant 0 : index
    %c0_91 = arith.constant 0 : index
    %104 = vector.load %arg15[%c0_89, %c0_90, %c0_91] : memref<1x8x8xf32, #tpu.memory_space<vmem>>, vector<1x8x8xf32>
    %105 = vector.shape_cast %104 : vector<1x8x8xf32> to vector<8x8xf32>
    %106 = vector.shape_cast %103 : vector<8x8xf32> to vector<1x8x8xf32>
    tpu.vector_store %arg15[%c0_89, %c0_90, %c0_91], %106 {strides = array<i32>} : memref<1x8x8xf32, #tpu.memory_space<vmem>>, vector<1x8x8xf32>,
    %c15_i32 = arith.constant 15 : i32
    %107 = arith.cmpi eq, %arg0, %c15_i32 : i32
    %108 = arith.extui %107 : i1 to i32
    %c0_i32_92 = arith.constant 0 : i32
    %109 = arith.cmpi ne, %108, %c0_i32_92 : i32
    scf.if %109 {
      %c0_93 = arith.constant 0 : index
      %c0_94 = arith.constant 0 : index
      %110 = vector.load %arg18[%c0_93, %c0_94] : memref<8x96xf32, #tpu.memory_space<vmem>>, vector<8x96xf32>
      %c0_95 = arith.constant 0 : index
      %c0_96 = arith.constant 0 : index
      %111 = vector.load %arg16[%c0_95, %c0_96] : memref<8x96xf32, #tpu.memory_space<vmem>>, vector<8x96xf32>
      tpu.vector_store %arg16[%c0_95, %c0_96], %110 {strides = array<i32>} : memref<8x96xf32, #tpu.memory_space<vmem>>, vector<8x96xf32>,
      %c0_97 = arith.constant 0 : index
      %c0_98 = arith.constant 0 : index
      %112 = vector.load %arg19[%c0_97, %c0_98] : memref<8x96xf32, #tpu.memory_space<vmem>>, vector<8x96xf32>
      %c0_99 = arith.constant 0 : index
      %c0_100 = arith.constant 0 : index
      %113 = vector.load %arg17[%c0_99, %c0_100] : memref<8x96xf32, #tpu.memory_space<vmem>>, vector<8x96xf32>
      tpu.vector_store %arg17[%c0_99, %c0_100], %112 {strides = array<i32>} : memref<8x96xf32, #tpu.memory_space<vmem>>, vector<8x96xf32>,
    } else {
    }
    return
  }
  func.func @transform_0(%arg0: i32, %arg1: memref<2xi32, #tpu.memory_space<smem>>) -> (i32, i32, i32) {
    %c0_i32 = arith.constant 0 : i32
    %c0_i32_0 = arith.constant 0 : i32
    %c0_i32_1 = arith.constant 0 : i32
    return %arg0, %c0_i32, %c0_i32_0 : i32, i32, i32
  }
  func.func @transform_1(%arg0: i32, %arg1: memref<2xi32, #tpu.memory_space<smem>>) -> (i32, i32) {
    %c0_i32 = arith.constant 0 : i32
    %c0_i32_0 = arith.constant 0 : i32
    %c0_i32_1 = arith.constant 0 : i32
    return %c0_i32, %c0_i32_0 : i32, i32
  }
  func.func @transform_2(%arg0: i32, %arg1: memref<2xi32, #tpu.memory_space<smem>>) -> (i32, i32) {
    %c0_i32 = arith.constant 0 : i32
    %c0_i32_0 = arith.constant 0 : i32
    %c0_i32_1 = arith.constant 0 : i32
    return %c0_i32, %c0_i32_0 : i32, i32
  }
  func.func @transform_3(%arg0: i32, %arg1: memref<2xi32, #tpu.memory_space<smem>>) -> (i32, i32) {
    %c0_i32 = arith.constant 0 : i32
    %c0_i32_0 = arith.constant 0 : i32
    %c0_i32_1 = arith.constant 0 : i32
    return %c0_i32, %c0_i32_0 : i32, i32
  }
  func.func @transform_4(%arg0: i32, %arg1: memref<2xi32, #tpu.memory_space<smem>>) -> (i32, i32) {
    %c0_i32 = arith.constant 0 : i32
    %c0_i32_0 = arith.constant 0 : i32
    %c0_i32_1 = arith.constant 0 : i32
    return %c0_i32, %c0_i32_0 : i32, i32
  }
  func.func @transform_5(%arg0: i32, %arg1: memref<2xi32, #tpu.memory_space<smem>>) -> (i32, i32, i32) {
    %c0_i32 = arith.constant 0 : i32
    %c0_i32_0 = arith.constant 0 : i32
    %c0_i32_1 = arith.constant 0 : i32
    %c0_i32_2 = arith.constant 0 : i32
    return %c0_i32, %c0_i32_0, %c0_i32_1 : i32, i32, i32
  }
  func.func @transform_6(%arg0: i32, %arg1: memref<2xi32, #tpu.memory_space<smem>>) -> (i32, i32, i32) {
    %c0_i32 = arith.constant 0 : i32
    %c0_i32_0 = arith.constant 0 : i32
    %c0_i32_1 = arith.constant 0 : i32
    %c0_i32_2 = arith.constant 0 : i32
    return %c0_i32, %c0_i32_0, %c0_i32_1 : i32, i32, i32
  }
  func.func @transform_7(%arg0: i32, %arg1: memref<2xi32, #tpu.memory_space<smem>>) -> (i32, i32) {
    %c0_i32 = arith.constant 0 : i32
    %c0_i32_0 = arith.constant 0 : i32
    %c0_i32_1 = arith.constant 0 : i32
    return %c0_i32, %c0_i32_0 : i32, i32
  }
  func.func @transform_8(%arg0: i32, %arg1: memref<2xi32, #tpu.memory_space<smem>>) -> (i32, i32) {
    %c0_i32 = arith.constant 0 : i32
    %c0_i32_0 = arith.constant 0 : i32
    %c0_i32_1 = arith.constant 0 : i32
    return %c0_i32, %c0_i32_0 : i32, i32
  }
  func.func @transform_9(%arg0: i32, %arg1: memref<2xi32, #tpu.memory_space<smem>>) -> (i32, i32) {
    %c0_i32 = arith.constant 0 : i32
    %c0_i32_0 = arith.constant 0 : i32
    %c0_i32_1 = arith.constant 0 : i32
    return %c0_i32, %c0_i32_0 : i32, i32
  }
  func.func @transform_10(%arg0: i32, %arg1: memref<2xi32, #tpu.memory_space<smem>>) -> (i32, i32) {
    %c0_i32 = arith.constant 0 : i32
    %c0_i32_0 = arith.constant 0 : i32
    %c0_i32_1 = arith.constant 0 : i32
    return %c0_i32, %c0_i32_0 : i32, i32
  }
  func.func @transform_11(%arg0: i32, %arg1: memref<2xi32, #tpu.memory_space<smem>>) -> (i32, i32) {
    %c0_i32 = arith.constant 0 : i32
    %c0_i32_0 = arith.constant 0 : i32
    %c0_i32_1 = arith.constant 0 : i32
    return %c0_i32, %c0_i32_0 : i32, i32
  }
  func.func @transform_12(%arg0: i32, %arg1: memref<2xi32, #tpu.memory_space<smem>>) -> (i32, i32) {
    %c0_i32 = arith.constant 0 : i32
    %c0_i32_0 = arith.constant 0 : i32
    %c0_i32_1 = arith.constant 0 : i32
    return %c0_i32, %c0_i32_0 : i32, i32
  }
  func.func @transform_13(%arg0: i32, %arg1: memref<2xi32, #tpu.memory_space<smem>>) -> (i32, i32, i32) {
    %c0_i32 = arith.constant 0 : i32
    %c0_i32_0 = arith.constant 0 : i32
    %c0_i32_1 = arith.constant 0 : i32
    return %arg0, %c0_i32, %c0_i32_0 : i32, i32, i32
  }
  func.func @transform_14(%arg0: i32, %arg1: memref<2xi32, #tpu.memory_space<smem>>) -> (i32, i32) {
    %c0_i32 = arith.constant 0 : i32
    %c0_i32_0 = arith.constant 0 : i32
    %c0_i32_1 = arith.constant 0 : i32
    return %c0_i32, %c0_i32_0 : i32, i32
  }
  func.func @transform_15(%arg0: i32, %arg1: memref<2xi32, #tpu.memory_space<smem>>) -> (i32, i32) {
    %c0_i32 = arith.constant 0 : i32
    %c0_i32_0 = arith.constant 0 : i32
    %c0_i32_1 = arith.constant 0 : i32
    return %c0_i32, %c0_i32_0 : i32, i32
  }
}

</mosaic_0001>

<llo_original>
// kernel: mstcrn_forward_seq.1
$region0: #{mstcrn_forward_seq.1}
  #allocation0 [shape = 'u32[]', space=smem, size = 0x4, offset = 0x4, fixed_abs, tag = 'smem constant byte address 0x4 - core index']
  #allocation1 [shape = 'u32[144,128]{1,0:T(1,128)}', space=vmem, size = 0x12000, scoped, tag = 'internal scratch']
  #allocation2 [shape = 'f32[8,96]{1,0:T(8,128)}', space=vmem, size = 0x1000, scoped, tag = 'scratch operand']
  #allocation3 [shape = 'f32[8,96]{1,0:T(8,128)}', space=vmem, size = 0x1000, scoped, tag = 'scratch operand']
  #allocation4 [shape = 'f32[8,64]{1,0:T(8,128)}', space=vmem, size = 0x1000, scoped, tag = 'scratch operand']
  #allocation5 [shape = 'f32[8,192]{1,0:T(8,128)}', space=vmem, size = 0x2000, scoped, tag = 'scratch operand']
  #allocation6 [shape = 's32[1]{0}', space=sflag, size = 0x4, scoped, tag = 'scoped memory for mstcrn_forward_seq.1']
  #allocation7 [shape = 'u8[512]{0}', space=smem, size = 0x200, scoped, tag = 'prefetched SMEM operand 0']
  %s0 = inlined_call_operand.vmem [shape: s32[2], index: 0, kind: input, shape index: {}]
  %s1 = inlined_call_operand.vmem [shape: f32[16,8,12], index: 1, kind: input, shape index: {}]
  %s2 = inlined_call_operand.vmem [shape: f32[8,96], index: 2, kind: input, shape index: {}]
  %s3 = inlined_call_operand.vmem [shape: f32[8,96], index: 3, kind: input, shape index: {}]
  %s4 = inlined_call_operand.vmem [shape: bf16[12,32], index: 4, kind: input, shape index: {}]
  %s5 = inlined_call_operand.vmem [shape: f32[1,32], index: 5, kind: input, shape index: {}]
  %s6 = inlined_call_operand.vmem [shape: bf16[3,64,32], index: 6, kind: input, shape index: {}]
  %s7 = inlined_call_operand.vmem [shape: f32[3,1,32], index: 7, kind: input, shape index: {}]
  %s8 = inlined_call_operand.vmem [shape: bf16[192,96], index: 8, kind: input, shape index: {}]
  %s9 = inlined_call_operand.vmem [shape: f32[1,96], index: 9, kind: input, shape index: {}]
  %s10 = inlined_call_operand.vmem [shape: bf16[64,32], index: 10, kind: input, shape index: {}]
  %s11 = inlined_call_operand.vmem [shape: f32[1,32], index: 11, kind: input, shape index: {}]
  %s12 = inlined_call_operand.vmem [shape: bf16[32,8], index: 12, kind: input, shape index: {}]
  %s13 = inlined_call_operand.vmem [shape: f32[1,8], index: 13, kind: input, shape index: {}]
  %s14 = inlined_call_operand.vmem [shape: f32[16,8,8], index: 14, kind: output, shape index: {0}]
  %s15 = inlined_call_operand.hbm [shape: f32[8,96], index: 15, kind: output, shape index: {1}]
  %s16 = inlined_call_operand.hbm [shape: f32[8,96], index: 16, kind: output, shape index: {2}]
  %17 = xla_tuple %s14, %s15, %s16
  %s18 = sld [smem:[#allocation0]]
  $region113: #{mstcrn_forward_seq.1} parent=0
    _
  %s20 = ssub.s32 1, %s18
  %s21 = scalar_select 0, %s20, %s18
  %s22 = sshll.u32 %s0, 4
  %s23 = int_to_ptr.vmem [resolvable:$true] %s22
  %25 = dma.vmem_to_smem %s23, 16, [#allocation7], [#allocation6]
  %26 = dma.done [#allocation6], 16
  %27 = sfence
  $region1: #{mstcrn_forward_seq.1} parent=0
    #allocation8 [shape = 'u8[4096]{0}', space=vmem, size = 0x1000, scoped, tag = 'output window, operand 1, single buffered']
    #allocation9 [shape = 's32[2]{0}', space=sflag, size = 0x8, scoped, tag = 'scoped memory for mstcrn_forward_seq.1']
    #allocation10 [shape = 'u8[4096]{0}', space=vmem, size = 0x1000, scoped, tag = 'output window, operand 2, single buffered']
    #allocation11 [shape = 's32[1]{0}', space=sflag, size = 0x4, scoped, tag = 'scoped memory for mstcrn_forward_seq.1']
    %28 = vsyncpa [#allocation9], 0
    %29 = vsyncpa [#allocation11], 0
    loop: start=0, step=1, limit=18
    $region2: #{mstcrn_forward_seq.1} parent=1 // loop_pre_header
      _
    $region3: #{mstcrn_forward_seq.1} parent=1 // loop_header
      %s31 = sphi 0, %s35
      %p32 = scmp.ge.s32.totalorder %s31, 18
      %s41 = sphi 0, %s43
      %s44 = sphi 0, %s41
      %s45 = sphi 0, %s44
      %s61 = sphi 0, %s45
      %s65 = sphi 0, %s65
      %s67 = sphi 0, %s65
      %s68 = sphi 0, %s67
      %s82 = sphi 0, %s68
      %s86 = sphi 0, %s86
      %s88 = sphi 0, %s86
      %s89 = sphi 0, %s88
      %s103 = sphi 0, %s89
      %s107 = sphi 0, %s107
      %s109 = sphi 0, %s107
      %s110 = sphi 0, %s109
      %s124 = sphi 0, %s110
      %s128 = sphi 0, %s128
      %s130 = sphi 0, %s128
      %s131 = sphi 0, %s130
      %s145 = sphi 0, %s131
      %s149 = sphi 0, %s149
      %s151 = sphi 0, %s149
      %s152 = sphi 0, %s151
      %s166 = sphi 0, %s152
      %s170 = sphi 0, %s170
      %s172 = sphi 0, %s170
      %s173 = sphi 0, %s172
      %s187 = sphi 0, %s173
      %s191 = sphi 0, %s191
      %s193 = sphi 0, %s191
      %s194 = sphi 0, %s193
      %s208 = sphi 0, %s194
      %s212 = sphi 0, %s212
      %s214 = sphi 0, %s212
      %s215 = sphi 0, %s214
      %s229 = sphi 0, %s215
      %s233 = sphi 0, %s233
      %s235 = sphi 0, %s233
      %s236 = sphi 0, %s235
      %s250 = sphi 0, %s236
      %s254 = sphi 0, %s254
      %s256 = sphi 0, %s254
      %s257 = sphi 0, %s256
      %s271 = sphi 0, %s257
      %s275 = sphi 0, %s275
      %s277 = sphi 0, %s275
      %s278 = sphi 0, %s277
      %s292 = sphi 0, %s278
      %s296 = sphi 0, %s296
      %s298 = sphi 0, %s296
      %s299 = sphi 0, %s298
      %s313 = sphi 0, %s299
      %s319 = sphi 0, %s321
      %s322 = sphi 0, %s319
      %s323 = sphi 0, %s322
      %s339 = sphi 0, %s323
      %s343 = sphi 0, %s343
      %s345 = sphi 0, %s343
      %s346 = sphi 0, %s345
      %s360 = sphi 0, %s346
      %s364 = sphi 0, %s364
      %s366 = sphi 0, %s364
      %s367 = sphi 0, %s366
      %s381 = sphi 0, %s367
    $region4: #{mstcrn_forward_seq.1} parent=1 // loop_header_branch
      %34 = sbr.rel (%p32) target = $region8
    $region5: #{mstcrn_forward_seq.1} parent=1 // loop_body
      %s36 = ssub.s32 %s31, 1
      %s37 = ssub.s32 %s31, 2
      %s38 = sadd.s32 %s31, 1
      %s39 = ssub.s32 %s31, %s38
      %p40 = scmp.eq.s32.totalorder %s39, 0
      %s42 = sadd.s32 %s41, 1
      %s43 = scalar_select %p40, %s41, %s42
      %p46 = pneg %p40
      %p47 = scmp.eq.s32.totalorder %s31, 15
      %p48 = por %p46, %p47
      %p49 = scmp.ne.s32.totalorder %s41, %s44
      %p50 = scmp.eq.s32.totalorder %s31, 0
      %p51 = por %p49, %p50
      %p52 = scmp.ne.s32.totalorder %s41, %s44
      %p53 = scmp.eq.s32.totalorder %s36, 15
      %p54 = por %p52, %p53
      %p55 = scmp.ne.s32.totalorder %s44, %s45
      %p56 = scmp.eq.s32.totalorder %s36, 0
      %p57 = por %p55, %p56
      %p58 = scmp.ne.s32.totalorder %s44, %s45
      %p59 = scmp.eq.s32.totalorder %s37, 15
      %p60 = por %p58, %p59
      %p62 = scmp.ne.s32.totalorder %s45, %s61
      %p63 = scmp.eq.s32.totalorder %s37, 0
      %p64 = por %p62, %p63
      %s66 = sadd.s32 %s65, 1
      %p69 = scmp.eq.s32.totalorder %s31, 15
      %p70 = scmp.ne.s32.totalorder %s65, %s67
      %p71 = scmp.eq.s32.totalorder %s31, 0
      %p72 = por %p70, %p71
      %p73 = scmp.ne.s32.totalorder %s65, %s67
      %p74 = scmp.eq.s32.totalorder %s36, 15
      %p75 = por %p73, %p74
      %p76 = scmp.ne.s32.totalorder %s67, %s68
      %p77 = scmp.eq.s32.totalorder %s36, 0
      %p78 = por %p76, %p77
      %p79 = scmp.ne.s32.totalorder %s67, %s68
      %p80 = scmp.eq.s32.totalorder %s37, 15
      %p81 = por %p79, %p80
      %p83 = scmp.ne.s32.totalorder %s68, %s82
      %p84 = scmp.eq.s32.totalorder %s37, 0
      %p85 = por %p83, %p84
      %s87 = sadd.s32 %s86, 1
      %p90 = scmp.eq.s32.totalorder %s31, 15
      %p91 = scmp.ne.s32.totalorder %s86, %s88
      %p92 = scmp.eq.s32.totalorder %s31, 0
      %p93 = por %p91, %p92
      %p94 = scmp.ne.s32.totalorder %s86, %s88
      %p95 = scmp.eq.s32.totalorder %s36, 15
      %p96 = por %p94, %p95
      %p97 = scmp.ne.s32.totalorder %s88, %s89
      %p98 = scmp.eq.s32.totalorder %s36, 0
      %p99 = por %p97, %p98
      %p100 = scmp.ne.s32.totalorder %s88, %s89
      %p101 = scmp.eq.s32.totalorder %s37, 15
      %p102 = por %p100, %p101
      %p104 = scmp.ne.s32.totalorder %s89, %s103
      %p105 = scmp.eq.s32.totalorder %s37, 0
      %p106 = por %p104, %p105
      %s108 = sadd.s32 %s107, 1
      %p111 = scmp.eq.s32.totalorder %s31, 15
      %p112 = scmp.ne.s32.totalorder %s107, %s109
      %p113 = scmp.eq.s32.totalorder %s31, 0
      %p114 = por %p112, %p113
      %p115 = scmp.ne.s32.totalorder %s107, %s109
      %p116 = scmp.eq.s32.totalorder %s36, 15
      %p117 = por %p115, %p116
      %p118 = scmp.ne.s32.totalorder %s109, %s110
      %p119 = scmp.eq.s32.totalorder %s36, 0
      %p120 = por %p118, %p119
      %p121 = scmp.ne.s32.totalorder %s109, %s110
      %p122 = scmp.eq.s32.totalorder %s37, 15
      %p123 = por %p121, %p122
      %p125 = scmp.ne.s32.totalorder %s110, %s124
      %p126 = scmp.eq.s32.totalorder %s37, 0
      %p127 = por %p125, %p126
      %s129 = sadd.s32 %s128, 1
      %p132 = scmp.eq.s32.totalorder %s31, 15
      %p133 = scmp.ne.s32.totalorder %s128, %s130
      %p134 = scmp.eq.s32.totalorder %s31, 0
      %p135 = por %p133, %p134
      %p136 = scmp.ne.s32.totalorder %s128, %s130
      %p137 = scmp.eq.s32.totalorder %s36, 15
      %p138 = por %p136, %p137
      %p139 = scmp.ne.s32.totalorder %s130, %s131
      %p140 = scmp.eq.s32.totalorder %s36, 0
      %p141 = por %p139, %p140
      %p142 = scmp.ne.s32.totalorder %s130, %s131
      %p143 = scmp.eq.s32.totalorder %s37, 15
      %p144 = por %p142, %p143
      %p146 = scmp.ne.s32.totalorder %s131, %s145
      %p147 = scmp.eq.s32.totalorder %s37, 0
      %p148 = por %p146, %p147
      %s150 = sadd.s32 %s149, 1
      %p153 = scmp.eq.s32.totalorder %s31, 15
      %p154 = scmp.ne.s32.totalorder %s149, %s151
      %p155 = scmp.eq.s32.totalorder %s31, 0
      %p156 = por %p154, %p155
      %p157 = scmp.ne.s32.totalorder %s149, %s151
      %p158 = scmp.eq.s32.totalorder %s36, 15
      %p159 = por %p157, %p158
      %p160 = scmp.ne.s32.totalorder %s151, %s152
      %p161 = scmp.eq.s32.totalorder %s36, 0
      %p162 = por %p160, %p161
      %p163 = scmp.ne.s32.totalorder %s151, %s152
      %p164 = scmp.eq.s32.totalorder %s37, 15
      %p165 = por %p163, %p164
      %p167 = scmp.ne.s32.totalorder %s152, %s166
      %p168 = scmp.eq.s32.totalorder %s37, 0
      %p169 = por %p167, %p168
      %s171 = sadd.s32 %s170, 1
      %p174 = scmp.eq.s32.totalorder %s31, 15
      %p175 = scmp.ne.s32.totalorder %s170, %s172
      %p176 = scmp.eq.s32.totalorder %s31, 0
      %p177 = por %p175, %p176
      %p178 = scmp.ne.s32.totalorder %s170, %s172
      %p179 = scmp.eq.s32.totalorder %s36, 15
      %p180 = por %p178, %p179
      %p181 = scmp.ne.s32.totalorder %s172, %s173
      %p182 = scmp.eq.s32.totalorder %s36, 0
      %p183 = por %p181, %p182
      %p184 = scmp.ne.s32.totalorder %s172, %s173
      %p185 = scmp.eq.s32.totalorder %s37, 15
      %p186 = por %p184, %p185
      %p188 = scmp.ne.s32.totalorder %s173, %s187
      %p189 = scmp.eq.s32.totalorder %s37, 0
      %p190 = por %p188, %p189
      %s192 = sadd.s32 %s191, 1
      %p195 = scmp.eq.s32.totalorder %s31, 15
      %p196 = scmp.ne.s32.totalorder %s191, %s193
      %p197 = scmp.eq.s32.totalorder %s31, 0
      %p198 = por %p196, %p197
      %p199 = scmp.ne.s32.totalorder %s191, %s193
      %p200 = scmp.eq.s32.totalorder %s36, 15
      %p201 = por %p199, %p200
      %p202 = scmp.ne.s32.totalorder %s193, %s194
      %p203 = scmp.eq.s32.totalorder %s36, 0
      %p204 = por %p202, %p203
      %p205 = scmp.ne.s32.totalorder %s193, %s194
      %p206 = scmp.eq.s32.totalorder %s37, 15
      %p207 = por %p205, %p206
      %p209 = scmp.ne.s32.totalorder %s194, %s208
      %p210 = scmp.eq.s32.totalorder %s37, 0
      %p211 = por %p209, %p210
      %s213 = sadd.s32 %s212, 1
      %p216 = scmp.eq.s32.totalorder %s31, 15
      %p217 = scmp.ne.s32.totalorder %s212, %s214
      %p218 = scmp.eq.s32.totalorder %s31, 0
      %p219 = por %p217, %p218
      %p220 = scmp.ne.s32.totalorder %s212, %s214
      %p221 = scmp.eq.s32.totalorder %s36, 15
      %p222 = por %p220, %p221
      %p223 = scmp.ne.s32.totalorder %s214, %s215
      %p224 = scmp.eq.s32.totalorder %s36, 0
      %p225 = por %p223, %p224
      %p226 = scmp.ne.s32.totalorder %s214, %s215
      %p227 = scmp.eq.s32.totalorder %s37, 15
      %p228 = por %p226, %p227
      %p230 = scmp.ne.s32.totalorder %s215, %s229
      %p231 = scmp.eq.s32.totalorder %s37, 0
      %p232 = por %p230, %p231
      %s234 = sadd.s32 %s233, 1
      %p237 = scmp.eq.s32.totalorder %s31, 15
      %p238 = scmp.ne.s32.totalorder %s233, %s235
      %p239 = scmp.eq.s32.totalorder %s31, 0
      %p240 = por %p238, %p239
      %p241 = scmp.ne.s32.totalorder %s233, %s235
      %p242 = scmp.eq.s32.totalorder %s36, 15
      %p243 = por %p241, %p242
      %p244 = scmp.ne.s32.totalorder %s235, %s236
      %p245 = scmp.eq.s32.totalorder %s36, 0
      %p246 = por %p244, %p245
      %p247 = scmp.ne.s32.totalorder %s235, %s236
      %p248 = scmp.eq.s32.totalorder %s37, 15
      %p249 = por %p247, %p248
      %p251 = scmp.ne.s32.totalorder %s236, %s250
      %p252 = scmp.eq.s32.totalorder %s37, 0
      %p253 = por %p251, %p252
      %s255 = sadd.s32 %s254, 1
      %p258 = scmp.eq.s32.totalorder %s31, 15
      %p259 = scmp.ne.s32.totalorder %s254, %s256
      %p260 = scmp.eq.s32.totalorder %s31, 0
      %p261 = por %p259, %p260
      %p262 = scmp.ne.s32.totalorder %s254, %s256
      %p263 = scmp.eq.s32.totalorder %s36, 15
      %p264 = por %p262, %p263
      %p265 = scmp.ne.s32.totalorder %s256, %s257
      %p266 = scmp.eq.s32.totalorder %s36, 0
      %p267 = por %p265, %p266
      %p268 = scmp.ne.s32.totalorder %s256, %s257
      %p269 = scmp.eq.s32.totalorder %s37, 15
      %p270 = por %p268, %p269
      %p272 = scmp.ne.s32.totalorder %s257, %s271
      %p273 = scmp.eq.s32.totalorder %s37, 0
      %p274 = por %p272, %p273
      %s276 = sadd.s32 %s275, 1
      %p279 = scmp.eq.s32.totalorder %s31, 15
      %p280 = scmp.ne.s32.totalorder %s275, %s277
      %p281 = scmp.eq.s32.totalorder %s31, 0
      %p282 = por %p280, %p281
      %p283 = scmp.ne.s32.totalorder %s275, %s277
      %p284 = scmp.eq.s32.totalorder %s36, 15
      %p285 = por %p283, %p284
      %p286 = scmp.ne.s32.totalorder %s277, %s278
      %p287 = scmp.eq.s32.totalorder %s36, 0
      %p288 = por %p286, %p287
      %p289 = scmp.ne.s32.totalorder %s277, %s278
      %p290 = scmp.eq.s32.totalorder %s37, 15
      %p291 = por %p289, %p290
      %p293 = scmp.ne.s32.totalorder %s278, %s292
      %p294 = scmp.eq.s32.totalorder %s37, 0
      %p295 = por %p293, %p294
      %s297 = sadd.s32 %s296, 1
      %p300 = scmp.eq.s32.totalorder %s31, 15
      %p301 = scmp.ne.s32.totalorder %s296, %s298
      %p302 = scmp.eq.s32.totalorder %s31, 0
      %p303 = por %p301, %p302
      %p304 = scmp.ne.s32.totalorder %s296, %s298
      %p305 = scmp.eq.s32.totalorder %s36, 15
      %p306 = por %p304, %p305
      %p307 = scmp.ne.s32.totalorder %s298, %s299
      %p308 = scmp.eq.s32.totalorder %s36, 0
      %p309 = por %p307, %p308
      %p310 = scmp.ne.s32.totalorder %s298, %s299
      %p311 = scmp.eq.s32.totalorder %s37, 15
      %p312 = por %p310, %p311
      %p314 = scmp.ne.s32.totalorder %s299, %s313
      %p315 = scmp.eq.s32.totalorder %s37, 0
      %p316 = por %p314, %p315
      %s317 = ssub.s32 %s31, %s38
      %p318 = scmp.eq.s32.totalorder %s317, 0
      %s320 = sadd.s32 %s319, 1
      %s321 = scalar_select %p318, %s319, %s320
      %p324 = pneg %p318
      %p325 = scmp.eq.s32.totalorder %s31, 15
      %p326 = por %p324, %p325
      %p327 = scmp.ne.s32.totalorder %s319, %s322
      %p328 = scmp.eq.s32.totalorder %s31, 0
      %p329 = por %p327, %p328
      %p330 = scmp.ne.s32.totalorder %s319, %s322
      %p331 = scmp.eq.s32.totalorder %s36, 15
      %p332 = por %p330, %p331
      %p333 = scmp.ne.s32.totalorder %s322, %s323
      %p334 = scmp.eq.s32.totalorder %s36, 0
      %p335 = por %p333, %p334
      %p336 = scmp.ne.s32.totalorder %s322, %s323
      %p337 = scmp.eq.s32.totalorder %s37, 15
      %p338 = por %p336, %p337
      %p340 = scmp.ne.s32.totalorder %s323, %s339
      %p341 = scmp.eq.s32.totalorder %s37, 0
      %p342 = por %p340, %p341
      %s344 = sadd.s32 %s343, 1
      %p347 = scmp.eq.s32.totalorder %s31, 15
      %p348 = scmp.ne.s32.totalorder %s343, %s345
      %p349 = scmp.eq.s32.totalorder %s31, 0
      %p350 = por %p348, %p349
      %p351 = scmp.ne.s32.totalorder %s343, %s345
      %p352 = scmp.eq.s32.totalorder %s36, 15
      %p353 = por %p351, %p352
      %p354 = scmp.ne.s32.totalorder %s345, %s346
      %p355 = scmp.eq.s32.totalorder %s36, 0
      %p356 = por %p354, %p355
      %p357 = scmp.ne.s32.totalorder %s345, %s346
      %p358 = scmp.eq.s32.totalorder %s37, 15
      %p359 = por %p357, %p358
      %p361 = scmp.ne.s32.totalorder %s346, %s360
      %p362 = scmp.eq.s32.totalorder %s37, 0
      %p363 = por %p361, %p362
      %s365 = sadd.s32 %s364, 1
      %p368 = scmp.eq.s32.totalorder %s31, 15
      %p369 = scmp.ne.s32.totalorder %s364, %s366
      %p370 = scmp.eq.s32.totalorder %s31, 0
      %p371 = por %p369, %p370
      %p372 = scmp.ne.s32.totalorder %s364, %s366
      %p373 = scmp.eq.s32.totalorder %s36, 15
      %p374 = por %p372, %p373
      %p375 = scmp.ne.s32.totalorder %s366, %s367
      %p376 = scmp.eq.s32.totalorder %s36, 0
      %p377 = por %p375, %p376
      %p378 = scmp.ne.s32.totalorder %s366, %s367
      %p379 = scmp.eq.s32.totalorder %s37, 15
      %p380 = por %p378, %p379
      %p382 = scmp.ne.s32.totalorder %s367, %s381
      %p383 = scmp.eq.s32.totalorder %s37, 0
      %p384 = por %p382, %p383
      %p385 = scmp.le.s32.totalorder 1, %s31
      %p386 = scmp.lt.s32.totalorder %s31, 17
      %p387 = pnand %p385, %p386
      %p388 = pneg %p387
      // Predicated region
      $region9: #{mstcrn_forward_seq.1} parent=5 // pred_check
        _
      $region10: #{mstcrn_forward_seq.1} parent=5 // pred_check_branch
        %390 = sbr.rel (%p387) target = $region12
      $region11: #{mstcrn_forward_seq.1} parent=5 // pred_region
        %s391 = ssub.s32 %s31, 1
        // Predicated region
        $region13: #{mstcrn_forward_seq.1} parent=11 // pred_check
          %p392 = pneg %p78
        $region14: #{mstcrn_forward_seq.1} parent=11 // pred_check_branch
          %394 = sbr.rel (%p392) target = $region16
        $region15: #{mstcrn_forward_seq.1} parent=11 // pred_region
          _
        $region16: #{mstcrn_forward_seq.1} parent=11 // pred_fallthru
          _
        // Predicated region
        $region17: #{mstcrn_forward_seq.1} parent=11 // pred_check
          %p395 = pneg %p99
        $region18: #{mstcrn_forward_seq.1} parent=11 // pred_check_branch
          %397 = sbr.rel (%p395) target = $region20
        $region19: #{mstcrn_forward_seq.1} parent=11 // pred_region
          _
        $region20: #{mstcrn_forward_seq.1} parent=11 // pred_fallthru
          _
        // Predicated region
        $region21: #{mstcrn_forward_seq.1} parent=11 // pred_check
          %p398 = pneg %p120
        $region22: #{mstcrn_forward_seq.1} parent=11 // pred_check_branch
          %400 = sbr.rel (%p398) target = $region24
        $region23: #{mstcrn_forward_seq.1} parent=11 // pred_region
          _
        $region24: #{mstcrn_forward_seq.1} parent=11 // pred_fallthru
          _
        // Predicated region
        $region25: #{mstcrn_forward_seq.1} parent=11 // pred_check
          %p401 = pneg %p141
        $region26: #{mstcrn_forward_seq.1} parent=11 // pred_check_branch
          %403 = sbr.rel (%p401) target = $region28
        $region27: #{mstcrn_forward_seq.1} parent=11 // pred_region
          _
        $region28: #{mstcrn_forward_seq.1} parent=11 // pred_fallthru
          _
        // Predicated region
        $region29: #{mstcrn_forward_seq.1} parent=11 // pred_check
          %p404 = pneg %p162
        $region30: #{mstcrn_forward_seq.1} parent=11 // pred_check_branch
          %406 = sbr.rel (%p404) target = $region32
        $region31: #{mstcrn_forward_seq.1} parent=11 // pred_region
          _
        $region32: #{mstcrn_forward_seq.1} parent=11 // pred_fallthru
          _
        // Predicated region
        $region33: #{mstcrn_forward_seq.1} parent=11 // pred_check
          %p407 = pneg %p183
        $region34: #{mstcrn_forward_seq.1} parent=11 // pred_check_branch
          %409 = sbr.rel (%p407) target = $region36
        $region35: #{mstcrn_forward_seq.1} parent=11 // pred_region
          _
        $region36: #{mstcrn_forward_seq.1} parent=11 // pred_fallthru
          _
        // Predicated region
        $region37: #{mstcrn_forward_seq.1} parent=11 // pred_check
          %p410 = pneg %p204
        $region38: #{mstcrn_forward_seq.1} parent=11 // pred_check_branch
          %412 = sbr.rel (%p410) target = $region40
        $region39: #{mstcrn_forward_seq.1} parent=11 // pred_region
          _
        $region40: #{mstcrn_forward_seq.1} parent=11 // pred_fallthru
          _
        // Predicated region
        $region41: #{mstcrn_forward_seq.1} parent=11 // pred_check
          %p413 = pneg %p225
        $region42: #{mstcrn_forward_seq.1} parent=11 // pred_check_branch
          %415 = sbr.rel (%p413) target = $region44
        $region43: #{mstcrn_forward_seq.1} parent=11 // pred_region
          _
        $region44: #{mstcrn_forward_seq.1} parent=11 // pred_fallthru
          _
        // Predicated region
        $region45: #{mstcrn_forward_seq.1} parent=11 // pred_check
          %p416 = pneg %p246
        $region46: #{mstcrn_forward_seq.1} parent=11 // pred_check_branch
          %418 = sbr.rel (%p416) target = $region48
        $region47: #{mstcrn_forward_seq.1} parent=11 // pred_region
          _
        $region48: #{mstcrn_forward_seq.1} parent=11 // pred_fallthru
          _
        // Predicated region
        $region49: #{mstcrn_forward_seq.1} parent=11 // pred_check
          %p419 = pneg %p267
        $region50: #{mstcrn_forward_seq.1} parent=11 // pred_check_branch
          %421 = sbr.rel (%p419) target = $region52
        $region51: #{mstcrn_forward_seq.1} parent=11 // pred_region
          _
        $region52: #{mstcrn_forward_seq.1} parent=11 // pred_fallthru
          _
        // Predicated region
        $region53: #{mstcrn_forward_seq.1} parent=11 // pred_check
          %p422 = pneg %p288
        $region54: #{mstcrn_forward_seq.1} parent=11 // pred_check_branch
          %424 = sbr.rel (%p422) target = $region56
        $region55: #{mstcrn_forward_seq.1} parent=11 // pred_region
          _
        $region56: #{mstcrn_forward_seq.1} parent=11 // pred_fallthru
          _
        // Predicated region
        $region57: #{mstcrn_forward_seq.1} parent=11 // pred_check
          %p425 = pneg %p309
        $region58: #{mstcrn_forward_seq.1} parent=11 // pred_check_branch
          %427 = sbr.rel (%p425) target = $region60
        $region59: #{mstcrn_forward_seq.1} parent=11 // pred_region
          _
        $region60: #{mstcrn_forward_seq.1} parent=11 // pred_fallthru
          _
      $region12: #{mstcrn_forward_seq.1} parent=5 // pred_fallthru
        _
      %p428 = scmp.lt.s32.totalorder %s31, 16
      // Predicated region
      $region61: #{mstcrn_forward_seq.1} parent=5 // pred_check
        %p429 = pneg %p428
      $region62: #{mstcrn_forward_seq.1} parent=5 // pred_check_branch
        %431 = sbr.rel (%p429) target = $region64
      $region63: #{mstcrn_forward_seq.1} parent=5 // pred_region
        // Predicated region
        $region65: #{mstcrn_forward_seq.1} parent=63 // pred_check
          %p432 = pneg %p51
        $region66: #{mstcrn_forward_seq.1} parent=63 // pred_check_branch
          %434 = sbr.rel (%p432) target = $region68
        $region67: #{mstcrn_forward_seq.1} parent=63 // pred_region
          %p435 = scmp.lt.s32.totalorder %s31, 15
          %s436 = scalar_select %p435, %s31, 15
          %s437 = smul.addr %s436, 8
          %s438 = scalar_lea.vmem %s1, %s437
        $region68: #{mstcrn_forward_seq.1} parent=63 // pred_fallthru
          _
      $region64: #{mstcrn_forward_seq.1} parent=5 // pred_fallthru
        _
      %p439 = scmp.le.s32.totalorder 1, %s31
      %p440 = scmp.lt.s32.totalorder %s31, 17
      %p441 = pnand %p439, %p440
      %p442 = pneg %p441
      // Predicated region
      $region69: #{mstcrn_forward_seq.1} parent=5 // pred_check
        _
      $region70: #{mstcrn_forward_seq.1} parent=5 // pred_check_branch
        %444 = sbr.rel (%p441) target = $region72
      $region71: #{mstcrn_forward_seq.1} parent=5 // pred_region
        %s445 = ssub.s32 %s31, 1
        %p446 = scmp.lt.s32.totalorder %s36, 15
        %s447 = scalar_select %p446, %s36, 15
        %s448 = smul.addr %s447, 8
        %s449 = scalar_lea.vmem %s1, %s448
        %p450 = pneg %p57
        %p451 = pneg %p54
        %p452 = pneg %p78
        %p453 = pneg %p75
        %p454 = pneg %p99
        %p455 = pneg %p96
        %p456 = pneg %p120
        %p457 = pneg %p117
        %p458 = pneg %p141
        %p459 = pneg %p138
        %p460 = pneg %p162
        %p461 = pneg %p159
        %p462 = pneg %p183
        %p463 = pneg %p180
        %p464 = pneg %p204
        %p465 = pneg %p201
        %p466 = pneg %p225
        %p467 = pneg %p222
        %p468 = pneg %p246
        %p469 = pneg %p243
        %p470 = pneg %p267
        %p471 = pneg %p264
        %p472 = pneg %p288
        %p473 = pneg %p285
        %p474 = pneg %p309
        %p475 = pneg %p306
        %p476 = pneg %p335
        %p477 = pneg %p332
        %p478 = scmp.lt.s32.totalorder %s36, 15
        %s479 = scalar_select %p478, %s36, 15
        %s480 = smul.addr %s479, 8
        %s481 = scalar_lea.vmem %s14, %s480
        %p482 = pneg %p356
        %p483 = pneg %p353
        %p484 = pneg %p377
        %p485 = pneg %p374
        %p486 = scmp.lt.s32.totalorder %s36, 15
        %s487 = scalar_select %p486, %s36, 15
        %s488 = smul.addr %s487, 8
        %s489 = scalar_lea.vmem %s1, %s488
        %p490 = scmp.lt.s32.totalorder %s36, 15
        %s491 = scalar_select %p490, %s36, 15
        %s492 = smul.addr %s491, 8
        %s493 = scalar_lea.vmem %s14, %s492
        %p495 = scmp.eq.s32.totalorder %s36, 0
        // Predicated region
        $region73: #{mstcrn_forward_seq.1} parent=71 // pred_check
          %p496 = pneg %p495
        $region74: #{mstcrn_forward_seq.1} parent=71 // pred_check_branch
          %498 = sbr.rel (%p496) target = $region76
        $region75: #{mstcrn_forward_seq.1} parent=71 // pred_region
          %v499 = vld [vmem:[%s2] sm:$0xff]
          %vm500 = vcmask 785408
          %501 = vst.msk [vmem:[#allocation2] sm:$0xff] %vm500, %v499
          %v502 = vld [vmem:[%s3] sm:$0xff]
          %503 = vst.msk [vmem:[#allocation3] sm:$0xff] %vm500, %v502
        $region76: #{mstcrn_forward_seq.1} parent=71 // pred_fallthru
          _
        %v504 = vld [vmem:[%s489] sm:$0xff]
        %v505 = vpack.c.bf16 %v504, %v504
        %v506 = vld [vmem:[%s4] sm:$0xf]
        %v507 = vld [vmem:[%s4 + $0x4] sm:$0x3]
        %v508 = vld [vmem:[%s5] sm:$0x1]
        %v510 = vlaneseq
        %v511 = vshrl.u32 %v510, 7
        %v512 = vsub.s32 0, %v511
        %v513 = vrot.slane %v508, %v512
        %v517 = vunpack.c.l.b16 %v506
        %v518 = vunpack.c.l.b16 %v507
        %v519 = vpack.c.b16 %v518, %v517
        %vm520 = vcmask 97280
        %v522 = vsel %vm520, %v505, 0
        %vm524 = vcmask 1045504
        %v526 = vsel %vm524, %v519, 0
        %528 = vmatprep.subr.bf16.mxu0 0
        %529 = vmatpush1.bf16.msra.mxu0 0
        %530 = vmatprep.subr.bf16.mxu0 0
        %531 = vmatpush1.bf16.msra.mxu0 0
        %532 = vmatprep.subr.bf16.mxu0 0
        %533 = vmatpush1.bf16.msra.mxu0 0
        %534 = vmatprep.subr.bf16.mxu0 0
        %535 = vmatpush1.bf16.msra.mxu0 0
        %536 = vmatprep.subr.bf16.mxu0 0
        %537 = vmatpush1.bf16.msra.mxu0 0
        %538 = vmatprep.subr.bf16.mxu0 0
        %539 = vmatpush1.bf16.msra.mxu0 0
        %540 = vmatprep.subr.bf16.mxu0 0
        %541 = vmatpush1.bf16.msra.mxu0 0
        %542 = vmatprep.subr.bf16.mxu0 0
        %543 = vmatpush1.bf16.msra.mxu0 %v526
        %544 = vmatprep.subr.bf16.mxu0 0
        %545 = vmatpush2.bf16.msra.mxu0 0
        %546 = vmatprep.subr.bf16.mxu0 0
        %547 = vmatpush2.bf16.msra.mxu0 0
        %548 = vmatprep.subr.bf16.mxu0 0
        %549 = vmatpush2.bf16.msra.mxu0 0
        %550 = vmatprep.subr.bf16.mxu0 0
        %551 = vmatpush2.bf16.msra.mxu0 0
        %552 = vmatprep.subr.bf16.mxu0 0
        %553 = vmatpush2.bf16.msra.mxu0 0
        %554 = vmatprep.subr.bf16.mxu0 0
        %555 = vmatpush2.bf16.msra.mxu0 0
        %556 = vmatprep.subr.bf16.mxu0 0
        %557 = vmatpush2.bf16.msra.mxu0 0
        %558 = vmatprep.subr.bf16.mxu0 0
        %559 = vmatpush2.bf16.msra.mxu0 0
        %560 = vmatprep.mubr.bf16.mxu0 0
        %561 = vmatmul.mubr.bf16.gmra.mxu0 %v522
        %v562 = vpop.f32.mrf.mxu0
        %v563 = vadd.f32 %v513, %v562
        %v564 = vpop.f32.mrf.mxu0
        %v565 = vpop.f32.mrf.mxu0
        %v566 = vpop.f32.mrf.mxu0
        %567 = vdwg.mxu0
        %v568 = vmax.f32 %v563, 0.0
        %vm569 = vcmask 261120
        %570 = vst.msk [vmem:[#allocation4] sm:$0xff] %vm569, %v568
        %v571 = vld [vmem:[#allocation2] sm:$0xff]
        %573 = vrot.lane.b32.xlu0 %v571, 32
        %v574 = vpop.permute.xlu0 %573
        %vm576 = vcmask 523520
        %577 = vst.msk [vmem:[#allocation4] sm:$0xff] %vm576, %v574
        %v578 = vld [vmem:[#allocation4] sm:$0xff]
        %v579 = vpack.c.bf16 %v578, %v578
        %v580 = vld [vmem:[%s6] sm:$0xf]
        %v581 = vld [vmem:[%s6 + $0x4] sm:$0xf]
        %v582 = vld [vmem:[%s6 + $0x8] sm:$0xf]
        %v583 = vld [vmem:[%s6 + $0xc] sm:$0xf]
        %v584 = vld [vmem:[%s6 + $0x10] sm:$0xf]
        %v585 = vld [vmem:[%s6 + $0x14] sm:$0xf]
        %v586 = vld [vmem:[%s6 + $0x18] sm:$0xf]
        %v587 = vld [vmem:[%s6 + $0x1c] sm:$0xf]
        %v588 = vld [vmem:[%s7] sm:$0x1]
        %v590 = vlaneseq
        %v591 = vshrl.u32 %v590, 7
        %v592 = vsub.s32 0, %v591
        %v593 = vrot.slane %v588, %v592
        %v603 = vunpack.c.l.b16 %v580
        %v604 = vunpack.c.l.b16 %v581
        %v605 = vunpack.c.l.b16 %v582
        %v606 = vunpack.c.l.b16 %v583
        %v607 = vunpack.c.l.b16 %v584
        %v608 = vunpack.c.l.b16 %v585
        %v609 = vunpack.c.l.b16 %v586
        %v610 = vunpack.c.l.b16 %v587
        %v611 = vpack.c.b16 %v604, %v603
        %v612 = vpack.c.b16 %v606, %v605
        %v613 = vpack.c.b16 %v608, %v607
        %v614 = vpack.c.b16 %v610, %v609
        %vm619 = vcmask 523264
        %v621 = vsel %vm619, %v579, 0
        %623 = vmatprep.subr.bf16.mxu0 0
        %624 = vmatpush1.bf16.msra.mxu0 0
        %625 = vmatprep.subr.bf16.mxu0 0
        %626 = vmatpush1.bf16.msra.mxu0 0
        %627 = vmatprep.subr.bf16.mxu0 0
        %628 = vmatpush1.bf16.msra.mxu0 0
        %629 = vmatprep.subr.bf16.mxu0 0
        %630 = vmatpush1.bf16.msra.mxu0 0
        %631 = vmatprep.subr.bf16.mxu0 0
        %632 = vmatpush1.bf16.msra.mxu0 %v614
        %633 = vmatprep.subr.bf16.mxu0 0
        %634 = vmatpush1.bf16.msra.mxu0 %v613
        %635 = vmatprep.subr.bf16.mxu0 0
        %636 = vmatpush1.bf16.msra.mxu0 %v612
        %637 = vmatprep.subr.bf16.mxu0 0
        %638 = vmatpush1.bf16.msra.mxu0 %v611
        %639 = vmatprep.subr.bf16.mxu0 0
        %640 = vmatpush2.bf16.msra.mxu0 0
        %641 = vmatprep.subr.bf16.mxu0 0
        %642 = vmatpush2.bf16.msra.mxu0 0
        %643 = vmatprep.subr.bf16.mxu0 0
        %644 = vmatpush2.bf16.msra.mxu0 0
        %645 = vmatprep.subr.bf16.mxu0 0
        %646 = vmatpush2.bf16.msra.mxu0 0
        %647 = vmatprep.subr.bf16.mxu0 0
        %648 = vmatpush2.bf16.msra.mxu0 0
        %649 = vmatprep.subr.bf16.mxu0 0
        %650 = vmatpush2.bf16.msra.mxu0 0
        %651 = vmatprep.subr.bf16.mxu0 0
        %652 = vmatpush2.bf16.msra.mxu0 0
        %653 = vmatprep.subr.bf16.mxu0 0
        %654 = vmatpush2.bf16.msra.mxu0 0
        %655 = vmatprep.mubr.bf16.mxu0 0
        %656 = vmatmul.mubr.bf16.gmra.mxu0 %v621
        %v657 = vpop.f32.mrf.mxu0
        %v658 = vadd.f32 %v593, %v657
        %v659 = vpop.f32.mrf.mxu0
        %v660 = vpop.f32.mrf.mxu0
        %v661 = vpop.f32.mrf.mxu0
        %662 = vdwg.mxu0
        %v663 = vmax.f32 %v658, 0.0
        %664 = vst.msk [vmem:[#allocation2] sm:$0xff] %vm569, %v663
        %665 = vst.msk [vmem:[#allocation4] sm:$0xff] %vm569, %v663
        %v666 = vld [vmem:[#allocation2] sm:$0xff]
        %667 = vst.msk [vmem:[#allocation4] sm:$0xff] %vm576, %v666
        %v668 = vld [vmem:[#allocation4] sm:$0xff]
        %v669 = vpack.c.bf16 %v668, %v668
        %s670 = scalar_lea.vmem %s6, 32
        %v671 = vld [vmem:[%s670] sm:$0xf]
        %v672 = vld [vmem:[%s670 + $0x4] sm:$0xf]
        %v673 = vld [vmem:[%s670 + $0x8] sm:$0xf]
        %v674 = vld [vmem:[%s670 + $0xc] sm:$0xf]
        %v675 = vld [vmem:[%s670 + $0x10] sm:$0xf]
        %v676 = vld [vmem:[%s670 + $0x14] sm:$0xf]
        %v677 = vld [vmem:[%s670 + $0x18] sm:$0xf]
        %v678 = vld [vmem:[%s670 + $0x1c] sm:$0xf]
        %s679 = scalar_lea.vmem %s7, 1
        %v680 = vld [vmem:[%s679] sm:$0x1]
        %v682 = vlaneseq
        %v683 = vshrl.u32 %v682, 7
        %v684 = vsub.s32 0, %v683
        %v685 = vrot.slane %v680, %v684
        %v695 = vunpack.c.l.b16 %v671
        %v696 = vunpack.c.l.b16 %v672
        %v697 = vunpack.c.l.b16 %v673
        %v698 = vunpack.c.l.b16 %v674
        %v699 = vunpack.c.l.b16 %v675
        %v700 = vunpack.c.l.b16 %v676
        %v701 = vunpack.c.l.b16 %v677
        %v702 = vunpack.c.l.b16 %v678
        %v703 = vpack.c.b16 %v696, %v695
        %v704 = vpack.c.b16 %v698, %v697
        %v705 = vpack.c.b16 %v700, %v699
        %v706 = vpack.c.b16 %v702, %v701
        %v712 = vsel %vm619, %v669, 0
        %714 = vmatprep.subr.bf16.mxu0 0
        %715 = vmatpush1.bf16.msra.mxu0 0
        %716 = vmatprep.subr.bf16.mxu0 0
        %717 = vmatpush1.bf16.msra.mxu0 0
        %718 = vmatprep.subr.bf16.mxu0 0
        %719 = vmatpush1.bf16.msra.mxu0 0
        %720 = vmatprep.subr.bf16.mxu0 0
        %721 = vmatpush1.bf16.msra.mxu0 0
        %722 = vmatprep.subr.bf16.mxu0 0
        %723 = vmatpush1.bf16.msra.mxu0 %v706
        %724 = vmatprep.subr.bf16.mxu0 0
        %725 = vmatpush1.bf16.msra.mxu0 %v705
        %726 = vmatprep.subr.bf16.mxu0 0
        %727 = vmatpush1.bf16.msra.mxu0 %v704
        %728 = vmatprep.subr.bf16.mxu0 0
        %729 = vmatpush1.bf16.msra.mxu0 %v703
        %730 = vmatprep.subr.bf16.mxu0 0
        %731 = vmatpush2.bf16.msra.mxu0 0
        %732 = vmatprep.subr.bf16.mxu0 0
        %733 = vmatpush2.bf16.msra.mxu0 0
        %734 = vmatprep.subr.bf16.mxu0 0
        %735 = vmatpush2.bf16.msra.mxu0 0
        %736 = vmatprep.subr.bf16.mxu0 0
        %737 = vmatpush2.bf16.msra.mxu0 0
        %738 = vmatprep.subr.bf16.mxu0 0
        %739 = vmatpush2.bf16.msra.mxu0 0
        %740 = vmatprep.subr.bf16.mxu0 0
        %741 = vmatpush2.bf16.msra.mxu0 0
        %742 = vmatprep.subr.bf16.mxu0 0
        %743 = vmatpush2.bf16.msra.mxu0 0
        %744 = vmatprep.subr.bf16.mxu0 0
        %745 = vmatpush2.bf16.msra.mxu0 0
        %746 = vmatprep.mubr.bf16.mxu0 0
        %747 = vmatmul.mubr.bf16.gmra.mxu0 %v712
        %v748 = vpop.f32.mrf.mxu0
        %v749 = vadd.f32 %v685, %v748
        %v750 = vpop.f32.mrf.mxu0
        %v751 = vpop.f32.mrf.mxu0
        %v752 = vpop.f32.mrf.mxu0
        %753 = vdwg.mxu0
        %v754 = vmax.f32 %v749, 0.0
        %756 = vrot.lane.b32.xlu0 %v754, 32
        %v757 = vpop.permute.xlu0 %756
        %759 = vst.msk [vmem:[#allocation2] sm:$0xff] %vm576, %v757
        %760 = vst.msk [vmem:[#allocation4] sm:$0xff] %vm569, %v754
        %v761 = vld [vmem:[#allocation2] sm:$0xff]
        %763 = vrot.lane.b32.xlu0 %v761, 96
        %v764 = vpop.permute.xlu0 %763
        %766 = vst.msk [vmem:[#allocation4] sm:$0xff] %vm576, %v764
        %v767 = vld [vmem:[#allocation4] sm:$0xff]
        %v768 = vpack.c.bf16 %v767, %v767
        %s769 = scalar_lea.vmem %s6, 64
        %v770 = vld [vmem:[%s769] sm:$0xf]
        %v771 = vld [vmem:[%s769 + $0x4] sm:$0xf]
        %v772 = vld [vmem:[%s769 + $0x8] sm:$0xf]
        %v773 = vld [vmem:[%s769 + $0xc] sm:$0xf]
        %v774 = vld [vmem:[%s769 + $0x10] sm:$0xf]
        %v775 = vld [vmem:[%s769 + $0x14] sm:$0xf]
        %v776 = vld [vmem:[%s769 + $0x18] sm:$0xf]
        %v777 = vld [vmem:[%s769 + $0x1c] sm:$0xf]
        %s778 = scalar_lea.vmem %s7, 2
        %v779 = vld [vmem:[%s778] sm:$0x1]
        %v781 = vlaneseq
        %v782 = vshrl.u32 %v781, 7
        %v783 = vsub.s32 0, %v782
        %v784 = vrot.slane %v779, %v783
        %v794 = vunpack.c.l.b16 %v770
        %v795 = vunpack.c.l.b16 %v771
        %v796 = vunpack.c.l.b16 %v772
        %v797 = vunpack.c.l.b16 %v773
        %v798 = vunpack.c.l.b16 %v774
        %v799 = vunpack.c.l.b16 %v775
        %v800 = vunpack.c.l.b16 %v776
        %v801 = vunpack.c.l.b16 %v777
        %v802 = vpack.c.b16 %v795, %v794
        %v803 = vpack.c.b16 %v797, %v796
        %v804 = vpack.c.b16 %v799, %v798
        %v805 = vpack.c.b16 %v801, %v800
        %v811 = vsel %vm619, %v768, 0
        %813 = vmatprep.subr.bf16.mxu0 0
        %814 = vmatpush1.bf16.msra.mxu0 0
        %815 = vmatprep.subr.bf16.mxu0 0
        %816 = vmatpush1.bf16.msra.mxu0 0
        %817 = vmatprep.subr.bf16.mxu0 0
        %818 = vmatpush1.bf16.msra.mxu0 0
        %819 = vmatprep.subr.bf16.mxu0 0
        %820 = vmatpush1.bf16.msra.mxu0 0
        %821 = vmatprep.subr.bf16.mxu0 0
        %822 = vmatpush1.bf16.msra.mxu0 %v805
        %823 = vmatprep.subr.bf16.mxu0 0
        %824 = vmatpush1.bf16.msra.mxu0 %v804
        %825 = vmatprep.subr.bf16.mxu0 0
        %826 = vmatpush1.bf16.msra.mxu0 %v803
        %827 = vmatprep.subr.bf16.mxu0 0
        %828 = vmatpush1.bf16.msra.mxu0 %v802
        %829 = vmatprep.subr.bf16.mxu0 0
        %830 = vmatpush2.bf16.msra.mxu0 0
        %831 = vmatprep.subr.bf16.mxu0 0
        %832 = vmatpush2.bf16.msra.mxu0 0
        %833 = vmatprep.subr.bf16.mxu0 0
        %834 = vmatpush2.bf16.msra.mxu0 0
        %835 = vmatprep.subr.bf16.mxu0 0
        %836 = vmatpush2.bf16.msra.mxu0 0
        %837 = vmatprep.subr.bf16.mxu0 0
        %838 = vmatpush2.bf16.msra.mxu0 0
        %839 = vmatprep.subr.bf16.mxu0 0
        %840 = vmatpush2.bf16.msra.mxu0 0
        %841 = vmatprep.subr.bf16.mxu0 0
        %842 = vmatpush2.bf16.msra.mxu0 0
        %843 = vmatprep.subr.bf16.mxu0 0
        %844 = vmatpush2.bf16.msra.mxu0 0
        %845 = vmatprep.mubr.bf16.mxu0 0
        %846 = vmatmul.mubr.bf16.gmra.mxu0 %v811
        %v847 = vpop.f32.mrf.mxu0
        %v848 = vadd.f32 %v784, %v847
        %v849 = vpop.f32.mrf.mxu0
        %v850 = vpop.f32.mrf.mxu0
        %v851 = vpop.f32.mrf.mxu0
        %852 = vdwg.mxu0
        %v853 = vmax.f32 %v848, 0.0
        %855 = vrot.lane.b32.xlu0 %v853, 64
        %v856 = vpop.permute.xlu0 %855
        %vm858 = vcmask 785920
        %859 = vst.msk [vmem:[#allocation2] sm:$0xff] %vm858, %v856
        %s860 = sld [smem:[#allocation7]]
        %s861 = sadd.s32 %s860, %s36
        %s862 = sld [smem:[#allocation7 + $0x1]]
        %p863 = scmp.eq.s32.totalorder %s862, 0
        %s864 = scalar_select %p863, 1, %s862
        %p865 = scmp.lt.s32.totalorder %s861, 0
        %s866 = ssub.s32 0, %s861
        %s867 = scalar_select %p865, %s866, %s861
        %p868 = scmp.lt.s32.totalorder %s864, 0
        %s869 = ssub.s32 0, %s864
        %s870 = scalar_select %p868, %s869, %s864
        %s871 = sdiv.u32.pop %s867, %s870
        %s872 = srem.u32.pop %s867, %s870
        %s873 = ssub.s32 0, %s872
        %s874 = scalar_select %p865, %s873, %s872
        %p875 = scmp.ne.s32.totalorder %s874, 0
        %p876 = scmp.lt.s32.totalorder %s874, 0
        %p877 = scmp.lt.s32.totalorder %s864, 0
        %p878 = pneg %p876
        %p879 = pneg %p877
        %p880 = pnand %p876, %p879
        %p881 = pneg %p880
        %p882 = pnand %p878, %p877
        %p883 = pneg %p882
        %p884 = por %p881, %p883
        %p885 = pnand %p884, %p875
        %p886 = pneg %p885
        %s887 = sadd.s32 %s874, %s864
        %s888 = scalar_select %p886, %s887, %s874
        %p889 = scmp.eq.s32.totalorder %s888, 0
        // Predicated region
        $region77: #{mstcrn_forward_seq.1} parent=71 // pred_check
          %p890 = pneg %p889
        $region78: #{mstcrn_forward_seq.1} parent=71 // pred_check_branch
          %892 = sbr.rel (%p890) target = $region80
        $region79: #{mstcrn_forward_seq.1} parent=71 // pred_region
          %v893 = vld [vmem:[#allocation2] sm:$0xff]
          %894 = vst.msk [vmem:[#allocation5] sm:$0xff] %vm569, %v893
          %v895 = vld [vmem:[#allocation3] sm:$0xff]
          %897 = vrot.lane.b32.xlu0 %v895, 32
          %v898 = vpop.permute.xlu0 %897
          %900 = vst.msk [vmem:[#allocation5] sm:$0xff] %vm576, %v898
          %v901 = vld [vmem:[#allocation2] sm:$0xff]
          %903 = vrot.lane.b32.xlu0 %v901, 32
          %v904 = vpop.permute.xlu0 %903
          %906 = vst.msk [vmem:[#allocation5] sm:$0xff] %vm858, %v904
          %v907 = vld [vmem:[#allocation3] sm:$0xff]
          %909 = vrot.lane.b32.xlu0 %v907, 64
          %v910 = vpop.permute.xlu0 %909
          %vm912 = vcmask 1048320
          %913 = vst.msk [vmem:[#allocation5] sm:$0xff] %vm912, %v910
          %v914 = vld [vmem:[#allocation2] sm:$0xff]
          %916 = vrot.lane.b32.xlu0 %v914, 64
          %v917 = vpop.permute.xlu0 %916
          %919 = vst.msk [vmem:[#allocation5 + $0x8] sm:$0xff] %vm569, %v917
          %v920 = vld [vmem:[#allocation3] sm:$0xff]
          %922 = vrot.lane.b32.xlu0 %v920, 96
          %v923 = vpop.permute.xlu0 %922
          %925 = vst.msk [vmem:[#allocation5 + $0x8] sm:$0xff] %vm576, %v923
          %v926 = vld [vmem:[#allocation5] sm:$0xff]
          %v927 = vld [vmem:[#allocation5 + $0x8] sm:$0xff]
          %v928 = vpack.c.bf16 %v926, %v926
          %v929 = vpack.c.bf16 %v927, %v927
          %v930 = vld [vmem:[%s8] sm:$0xf]
          %v931 = vld [vmem:[%s8 + $0x4] sm:$0xf]
          %v932 = vld [vmem:[%s8 + $0x8] sm:$0xf]
          %v933 = vld [vmem:[%s8 + $0xc] sm:$0xf]
          %v934 = vld [vmem:[%s8 + $0x10] sm:$0xf]
          %v935 = vld [vmem:[%s8 + $0x14] sm:$0xf]
          %v936 = vld [vmem:[%s8 + $0x18] sm:$0xf]
          %v937 = vld [vmem:[%s8 + $0x1c] sm:$0xf]
          %v938 = vld [vmem:[%s8 + $0x20] sm:$0xf]
          %v939 = vld [vmem:[%s8 + $0x24] sm:$0xf]
          %v940 = vld [vmem:[%s8 + $0x28] sm:$0xf]
          %v941 = vld [vmem:[%s8 + $0x2c] sm:$0xf]
          %v942 = vld [vmem:[%s8 + $0x30] sm:$0xf]
          %v943 = vld [vmem:[%s8 + $0x34] sm:$0xf]
          %v944 = vld [vmem:[%s8 + $0x38] sm:$0xf]
          %v945 = vld [vmem:[%s8 + $0x3c] sm:$0xf]
          %v946 = vld [vmem:[%s8 + $0x40] sm:$0xf]
          %v947 = vld [vmem:[%s8 + $0x44] sm:$0xf]
          %v948 = vld [vmem:[%s8 + $0x48] sm:$0xf]
          %v949 = vld [vmem:[%s8 + $0x4c] sm:$0xf]
          %v950 = vld [vmem:[%s8 + $0x50] sm:$0xf]
          %v951 = vld [vmem:[%s8 + $0x54] sm:$0xf]
          %v952 = vld [vmem:[%s8 + $0x58] sm:$0xf]
          %v953 = vld [vmem:[%s8 + $0x5c] sm:$0xf]
          %v954 = vld [vmem:[%s9] sm:$0x1]
          %v956 = vlaneseq
          %v957 = vshrl.u32 %v956, 7
          %v958 = vsub.s32 0, %v957
          %v959 = vrot.slane %v954, %v958
          %v985 = vunpack.c.l.b16 %v930
          %v986 = vunpack.c.l.b16 %v931
          %v987 = vunpack.c.l.b16 %v932
          %v988 = vunpack.c.l.b16 %v933
          %v989 = vunpack.c.l.b16 %v934
          %v990 = vunpack.c.l.b16 %v935
          %v991 = vunpack.c.l.b16 %v936
          %v992 = vunpack.c.l.b16 %v937
          %v993 = vunpack.c.l.b16 %v938
          %v994 = vunpack.c.l.b16 %v939
          %v995 = vunpack.c.l.b16 %v940
          %v996 = vunpack.c.l.b16 %v941
          %v997 = vunpack.c.l.b16 %v942
          %v998 = vunpack.c.l.b16 %v943
          %v999 = vunpack.c.l.b16 %v944
          %v1000 = vunpack.c.l.b16 %v945
          %v1001 = vunpack.c.l.b16 %v946
          %v1002 = vunpack.c.l.b16 %v947
          %v1003 = vunpack.c.l.b16 %v948
          %v1004 = vunpack.c.l.b16 %v949
          %v1005 = vunpack.c.l.b16 %v950
          %v1006 = vunpack.c.l.b16 %v951
          %v1007 = vunpack.c.l.b16 %v952
          %v1008 = vunpack.c.l.b16 %v953
          %v1009 = vpack.c.b16 %v986, %v985
          %v1010 = vpack.c.b16 %v988, %v987
          %v1011 = vpack.c.b16 %v990, %v989
          %v1012 = vpack.c.b16 %v992, %v991
          %v1013 = vpack.c.b16 %v994, %v993
          %v1014 = vpack.c.b16 %v996, %v995
          %v1015 = vpack.c.b16 %v998, %v997
          %v1016 = vpack.c.b16 %v1000, %v999
          %v1017 = vpack.c.b16 %v1002, %v1001
          %v1018 = vpack.c.b16 %v1004, %v1003
          %v1019 = vpack.c.b16 %v1006, %v1005
          %v1020 = vpack.c.b16 %v1008, %v1007
          %v1034 = vsel %vm619, %v929, 0
          %1036 = vmatprep.subr.bf16.mxu0 0
          %1037 = vmatpush1.bf16.msra.mxu0 %v1016
          %1038 = vmatprep.subr.bf16.mxu0 0
          %1039 = vmatpush1.bf16.msra.mxu0 %v1015
          %1040 = vmatprep.subr.bf16.mxu0 0
          %1041 = vmatpush1.bf16.msra.mxu0 %v1014
          %1042 = vmatprep.subr.bf16.mxu0 0
          %1043 = vmatpush1.bf16.msra.mxu0 %v1013
          %1044 = vmatprep.subr.bf16.mxu0 0
          %1045 = vmatpush1.bf16.msra.mxu0 %v1012
          %1046 = vmatprep.subr.bf16.mxu0 0
          %1047 = vmatpush1.bf16.msra.mxu0 %v1011
          %1048 = vmatprep.subr.bf16.mxu0 0
          %1049 = vmatpush1.bf16.msra.mxu0 %v1010
          %1050 = vmatprep.subr.bf16.mxu0 0
          %1051 = vmatpush1.bf16.msra.mxu0 %v1009
          %1052 = vmatprep.subr.bf16.mxu0 0
          %1053 = vmatpush2.bf16.msra.mxu0 0
          %1054 = vmatprep.subr.bf16.mxu0 0
          %1055 = vmatpush2.bf16.msra.mxu0 0
          %1056 = vmatprep.subr.bf16.mxu0 0
          %1057 = vmatpush2.bf16.msra.mxu0 0
          %1058 = vmatprep.subr.bf16.mxu0 0
          %1059 = vmatpush2.bf16.msra.mxu0 0
          %1060 = vmatprep.subr.bf16.mxu0 0
          %1061 = vmatpush2.bf16.msra.mxu0 %v1020
          %1062 = vmatprep.subr.bf16.mxu0 0
          %1063 = vmatpush2.bf16.msra.mxu0 %v1019
          %1064 = vmatprep.subr.bf16.mxu0 0
          %1065 = vmatpush2.bf16.msra.mxu0 %v1018
          %1066 = vmatprep.subr.bf16.mxu0 0
          %1067 = vmatpush2.bf16.msra.mxu0 %v1017
          %1068 = vmatprep.mubr.bf16.mxu0 %v1034
          %1069 = vmatmul.mubr.bf16.gmra.mxu0 %v928
          %v1070 = vpop.f32.mrf.mxu0
          %v1071 = vadd.f32 %v959, %v1070
          %v1072 = vpop.f32.mrf.mxu0
          %v1073 = vpop.f32.mrf.mxu0
          %v1074 = vpop.f32.mrf.mxu0
          %1075 = vdwg.mxu0
          %v1076 = vmax.f32 %v1071, 0.0
          %vm1077 = vcmask 785408
          %1078 = vst.msk [vmem:[#allocation3] sm:$0xff] %vm1077, %v1076
        $region80: #{mstcrn_forward_seq.1} parent=71 // pred_fallthru
          _
        %v1079 = vld [vmem:[#allocation2] sm:$0xff]
        %1081 = vrot.lane.b32.xlu0 %v1079, 64
        %v1082 = vpop.permute.xlu0 %1081
        %1084 = vst.msk [vmem:[#allocation4] sm:$0xff] %vm569, %v1082
        %v1085 = vld [vmem:[#allocation3] sm:$0xff]
        %1087 = vrot.lane.b32.xlu0 %v1085, 96
        %v1088 = vpop.permute.xlu0 %1087
        %1090 = vst.msk [vmem:[#allocation4] sm:$0xff] %vm576, %v1088
        %v1091 = vld [vmem:[#allocation4] sm:$0xff]
        %v1092 = vpack.c.bf16 %v1091, %v1091
        %v1093 = vld [vmem:[%s10] sm:$0xf]
        %v1094 = vld [vmem:[%s10 + $0x4] sm:$0xf]
        %v1095 = vld [vmem:[%s10 + $0x8] sm:$0xf]
        %v1096 = vld [vmem:[%s10 + $0xc] sm:$0xf]
        %v1097 = vld [vmem:[%s10 + $0x10] sm:$0xf]
        %v1098 = vld [vmem:[%s10 + $0x14] sm:$0xf]
        %v1099 = vld [vmem:[%s10 + $0x18] sm:$0xf]
        %v1100 = vld [vmem:[%s10 + $0x1c] sm:$0xf]
        %v1101 = vld [vmem:[%s11] sm:$0x1]
        %v1103 = vlaneseq
        %v1104 = vshrl.u32 %v1103, 7
        %v1105 = vsub.s32 0, %v1104
        %v1106 = vrot.slane %v1101, %v1105
        %v1116 = vunpack.c.l.b16 %v1093
        %v1117 = vunpack.c.l.b16 %v1094
        %v1118 = vunpack.c.l.b16 %v1095
        %v1119 = vunpack.c.l.b16 %v1096
        %v1120 = vunpack.c.l.b16 %v1097
        %v1121 = vunpack.c.l.b16 %v1098
        %v1122 = vunpack.c.l.b16 %v1099
        %v1123 = vunpack.c.l.b16 %v1100
        %v1124 = vpack.c.b16 %v1117, %v1116
        %v1125 = vpack.c.b16 %v1119, %v1118
        %v1126 = vpack.c.b16 %v1121, %v1120
        %v1127 = vpack.c.b16 %v1123, %v1122
        %v1133 = vsel %vm619, %v1092, 0
        %1135 = vmatprep.subr.bf16.mxu0 0
        %1136 = vmatpush1.bf16.msra.mxu0 0
        %1137 = vmatprep.subr.bf16.mxu0 0
        %1138 = vmatpush1.bf16.msra.mxu0 0
        %1139 = vmatprep.subr.bf16.mxu0 0
        %1140 = vmatpush1.bf16.msra.mxu0 0
        %1141 = vmatprep.subr.bf16.mxu0 0
        %1142 = vmatpush1.bf16.msra.mxu0 0
        %1143 = vmatprep.subr.bf16.mxu0 0
        %1144 = vmatpush1.bf16.msra.mxu0 %v1127
        %1145 = vmatprep.subr.bf16.mxu0 0
        %1146 = vmatpush1.bf16.msra.mxu0 %v1126
        %1147 = vmatprep.subr.bf16.mxu0 0
        %1148 = vmatpush1.bf16.msra.mxu0 %v1125
        %1149 = vmatprep.subr.bf16.mxu0 0
        %1150 = vmatpush1.bf16.msra.mxu0 %v1124
        %1151 = vmatprep.subr.bf16.mxu0 0
        %1152 = vmatpush2.bf16.msra.mxu0 0
        %1153 = vmatprep.subr.bf16.mxu0 0
        %1154 = vmatpush2.bf16.msra.mxu0 0
        %1155 = vmatprep.subr.bf16.mxu0 0
        %1156 = vmatpush2.bf16.msra.mxu0 0
        %1157 = vmatprep.subr.bf16.mxu0 0
        %1158 = vmatpush2.bf16.msra.mxu0 0
        %1159 = vmatprep.subr.bf16.mxu0 0
        %1160 = vmatpush2.bf16.msra.mxu0 0
        %1161 = vmatprep.subr.bf16.mxu0 0
        %1162 = vmatpush2.bf16.msra.mxu0 0
        %1163 = vmatprep.subr.bf16.mxu0 0
        %1164 = vmatpush2.bf16.msra.mxu0 0
        %1165 = vmatprep.subr.bf16.mxu0 0
        %1166 = vmatpush2.bf16.msra.mxu0 0
        %1167 = vmatprep.mubr.bf16.mxu0 0
        %1168 = vmatmul.mubr.bf16.gmra.mxu0 %v1133
        %v1169 = vpop.f32.mrf.mxu0
        %v1170 = vadd.f32 %v1106, %v1169
        %v1171 = vpop.f32.mrf.mxu0
        %v1172 = vpop.f32.mrf.mxu0
        %v1173 = vpop.f32.mrf.mxu0
        %1174 = vdwg.mxu0
        %v1175 = vmax.f32 %v1170, 0.0
        %v1176 = vpack.c.bf16 %v1175, %v1175
        %v1177 = vld [vmem:[%s12] sm:$0xf]
        %v1178 = vld [vmem:[%s12 + $0x4] sm:$0xf]
        %v1179 = vld [vmem:[%s12 + $0x8] sm:$0xf]
        %v1180 = vld [vmem:[%s12 + $0xc] sm:$0xf]
        %v1181 = vld [vmem:[%s13] sm:$0x1]
        %v1183 = vlaneseq
        %v1184 = vshrl.u32 %v1183, 7
        %v1185 = vsub.s32 0, %v1184
        %v1186 = vrot.slane %v1181, %v1185
        %v1192 = vunpack.c.l.b16 %v1177
        %v1193 = vunpack.c.l.b16 %v1178
        %v1194 = vunpack.c.l.b16 %v1179
        %v1195 = vunpack.c.l.b16 %v1180
        %v1196 = vpack.c.b16 %v1193, %v1192
        %v1197 = vpack.c.b16 %v1195, %v1194
        %v1201 = vsel %vm569, %v1176, 0
        %1203 = vmatprep.subr.bf16.mxu0 0
        %1204 = vmatpush1.bf16.msra.mxu0 0
        %1205 = vmatprep.subr.bf16.mxu0 0
        %1206 = vmatpush1.bf16.msra.mxu0 0
        %1207 = vmatprep.subr.bf16.mxu0 0
        %1208 = vmatpush1.bf16.msra.mxu0 0
        %1209 = vmatprep.subr.bf16.mxu0 0
        %1210 = vmatpush1.bf16.msra.mxu0 0
        %1211 = vmatprep.subr.bf16.mxu0 0
        %1212 = vmatpush1.bf16.msra.mxu0 0
        %1213 = vmatprep.subr.bf16.mxu0 0
        %1214 = vmatpush1.bf16.msra.mxu0 0
        %1215 = vmatprep.subr.bf16.mxu0 0
        %1216 = vmatpush1.bf16.msra.mxu0 %v1197
        %1217 = vmatprep.subr.bf16.mxu0 0
        %1218 = vmatpush1.bf16.msra.mxu0 %v1196
        %1219 = vmatprep.subr.bf16.mxu0 0
        %1220 = vmatpush2.bf16.msra.mxu0 0
        %1221 = vmatprep.subr.bf16.mxu0 0
        %1222 = vmatpush2.bf16.msra.mxu0 0
        %1223 = vmatprep.subr.bf16.mxu0 0
        %1224 = vmatpush2.bf16.msra.mxu0 0
        %1225 = vmatprep.subr.bf16.mxu0 0
        %1226 = vmatpush2.bf16.msra.mxu0 0
        %1227 = vmatprep.subr.bf16.mxu0 0
        %1228 = vmatpush2.bf16.msra.mxu0 0
        %1229 = vmatprep.subr.bf16.mxu0 0
        %1230 = vmatpush2.bf16.msra.mxu0 0
        %1231 = vmatprep.subr.bf16.mxu0 0
        %1232 = vmatpush2.bf16.msra.mxu0 0
        %1233 = vmatprep.subr.bf16.mxu0 0
        %1234 = vmatpush2.bf16.msra.mxu0 0
        %1235 = vmatprep.mubr.bf16.mxu0 0
        %1236 = vmatmul.mubr.bf16.gmra.mxu0 %v1201
        %v1237 = vpop.f32.mrf.mxu0
        %v1238 = vadd.f32 %v1186, %v1237
        %v1239 = vpop.f32.mrf.mxu0
        %v1240 = vpop.f32.mrf.mxu0
        %v1241 = vpop.f32.mrf.mxu0
        %1242 = vdwg.mxu0
        %vm1243 = vcmask 64512
        %v1244 = vsel %vm1243, %v1238, -inf
        %1245 = vmax.xlane.f32.xlu0 %v1244
        %v1246 = vpop.xlane.xlu0 %1245
        %v1247 = vsub.f32 %v1238, %v1246
        %v1248 = vmul.f32 %v1247, 1.442695
        %v1249 = vpow.pop %v1248
        %v1250 = vsel %vm1243, %v1249, 0.0
        %1251 = vadd.xlane.f32.xlu0 %v1250
        %v1252 = vpop.xlane.xlu0 %1251
        %v1253 = vlog2.pop %v1252
        %v1254 = vmul.f32 %v1253, 0.6931472
        %v1255 = vadd.f32 %v1246, %v1254
        %v1256 = vsub.f32 %v1238, %v1255
        %1257 = vst.msk [vmem:[%s493] sm:$0xff] %vm1243, %v1256
        %p1258 = scmp.eq.s32.totalorder %s36, 15
        // Predicated region
        $region81: #{mstcrn_forward_seq.1} parent=71 // pred_check
          %p1259 = pneg %p1258
        $region82: #{mstcrn_forward_seq.1} parent=71 // pred_check_branch
          %1261 = sbr.rel (%p1259) target = $region84
        $region83: #{mstcrn_forward_seq.1} parent=71 // pred_region
          %v1262 = vld [vmem:[#allocation2] sm:$0xff]
          %vm1263 = vcmask 785408
          %1264 = vst.msk [vmem:[#allocation8] sm:$0xff] %vm1263, %v1262
          %v1265 = vld [vmem:[#allocation3] sm:$0xff]
          %1266 = vst.msk [vmem:[#allocation10] sm:$0xff] %vm1263, %v1265
        $region84: #{mstcrn_forward_seq.1} parent=71 // pred_fallthru
          _
        %p1267 = scmp.lt.s32.totalorder %s36, 15
        %s1268 = scalar_select %p1267, %s36, 15
        %s1269 = smul.addr %s1268, 8
        %s1270 = scalar_lea.vmem %s14, %s1269
        // Predicated region
        $region85: #{mstcrn_forward_seq.1} parent=71 // pred_check
          %p1271 = pneg %p332
        $region86: #{mstcrn_forward_seq.1} parent=71 // pred_check_branch
          %1273 = sbr.rel (%p1271) target = $region88
        $region87: #{mstcrn_forward_seq.1} parent=71 // pred_region
          _
        $region88: #{mstcrn_forward_seq.1} parent=71 // pred_fallthru
          _
        // Predicated region
        $region89: #{mstcrn_forward_seq.1} parent=71 // pred_check
          %p1274 = pneg %p353
        $region90: #{mstcrn_forward_seq.1} parent=71 // pred_check_branch
          %1276 = sbr.rel (%p1274) target = $region92
        $region91: #{mstcrn_forward_seq.1} parent=71 // pred_region
          %s1278 = ssub.s32 128, 128
          %1279 = vsyncadd [#allocation9], %s1278
          %s1281 = sshll.u32 [#allocation8], 4
          %s1282 = int_to_ptr.vmem [resolvable:$true] %s1281
          %1284 = dma.vmem_to_hbm [thread:$0]  %s1282, 128, %s15, [#allocation9]
        $region92: #{mstcrn_forward_seq.1} parent=71 // pred_fallthru
          _
        // Predicated region
        $region93: #{mstcrn_forward_seq.1} parent=71 // pred_check
          %p1285 = pneg %p374
        $region94: #{mstcrn_forward_seq.1} parent=71 // pred_check_branch
          %1287 = sbr.rel (%p1285) target = $region96
        $region95: #{mstcrn_forward_seq.1} parent=71 // pred_region
          %s1289 = ssub.s32 128, 128
          %1290 = vsyncadd [#allocation11], %s1289
          %s1292 = sshll.u32 [#allocation10], 4
          %s1293 = int_to_ptr.vmem [resolvable:$true] %s1292
          %1295 = dma.vmem_to_hbm [thread:$0]  %s1293, 128, %s16, [#allocation11]
        $region96: #{mstcrn_forward_seq.1} parent=71 // pred_fallthru
          _
        // Predicated region
        $region97: #{mstcrn_forward_seq.1} parent=71 // pred_check
          %p1296 = pneg %p353
        $region98: #{mstcrn_forward_seq.1} parent=71 // pred_check_branch
          %1298 = sbr.rel (%p1296) target = $region100
        $region99: #{mstcrn_forward_seq.1} parent=71 // pred_region
          %1299 = dma.done [#allocation9], 128
        $region100: #{mstcrn_forward_seq.1} parent=71 // pred_fallthru
          _
        // Predicated region
        $region101: #{mstcrn_forward_seq.1} parent=71 // pred_check
          %p1300 = pneg %p374
        $region102: #{mstcrn_forward_seq.1} parent=71 // pred_check_branch
          %1302 = sbr.rel (%p1300) target = $region104
        $region103: #{mstcrn_forward_seq.1} parent=71 // pred_region
          %1303 = dma.done [#allocation11], 128
        $region104: #{mstcrn_forward_seq.1} parent=71 // pred_fallthru
          _
      $region72: #{mstcrn_forward_seq.1} parent=5 // pred_fallthru
        _
      %p1304 = scmp.le.s32.totalorder 2, %s31
      // Predicated region
      $region105: #{mstcrn_forward_seq.1} parent=5 // pred_check
        %p1305 = pneg %p1304
      $region106: #{mstcrn_forward_seq.1} parent=5 // pred_check_branch
        %1307 = sbr.rel (%p1305) target = $region108
      $region107: #{mstcrn_forward_seq.1} parent=5 // pred_region
        %s1308 = ssub.s32 %s31, 2
        // Predicated region
        $region109: #{mstcrn_forward_seq.1} parent=107 // pred_check
          %p1309 = pneg %p338
        $region110: #{mstcrn_forward_seq.1} parent=107 // pred_check_branch
          %1311 = sbr.rel (%p1309) target = $region112
        $region111: #{mstcrn_forward_seq.1} parent=107 // pred_region
          %p1312 = scmp.lt.s32.totalorder %s37, 15
          %s1313 = scalar_select %p1312, %s37, 15
          %s1314 = smul.addr %s1313, 8
          %s1315 = scalar_lea.vmem %s14, %s1314
        $region112: #{mstcrn_forward_seq.1} parent=107 // pred_fallthru
          _
      $region108: #{mstcrn_forward_seq.1} parent=5 // pred_fallthru
        _
    $region6: #{mstcrn_forward_seq.1} parent=1 // loop_footer
      %s35 = sadd.s32 1, %s31
    $region7: #{mstcrn_forward_seq.1} parent=1 // loop_footer_branch
      %30 = sbr.rel target = $region3
    $region8: #{mstcrn_forward_seq.1} parent=1 // loop_exit
      _
    %1316 = vsyncpa [#allocation9], 1
    %s1317 = scalar_lea.sflag [#allocation9], 1
    %1318 = vsyncpa %s1317, 1
    %1319 = vsyncpa [#allocation11], 1

</llo_original>
